<compile_context>
chip_gen: v7x
topology: tpu7x:2x2x1
jax: 0.10.0
libtpu: 0.0.40
codegen_flags: <defaults>
</compile_context>

<pallas_src>
import jax
import jax.numpy as jnp
from jax import lax
from jax.experimental import pallas as pl
from jax.experimental.pallas import tpu as pltpu

# ----- small GPT2 config (consistent with GPT2Config fields) -----
HIDDEN = 32
N_LAYERS = 2
N_HEADS = 2
HEAD_DIM = HIDDEN // N_HEADS
MAX_SEQ = 8
VOCAB = 128
LN_EPS = 1e-5
NEG_INF = -1e9
ATTN_SCALE = 1.0 / (HEAD_DIM ** 0.5)


# ---------------- in-kernel helpers (operate on jnp arrays) ----------------

def _gelu_new(x):
    # GPT2 "gelu_new": 0.5*x*(1+tanh(sqrt(2/pi)*(x+0.044715*x^3)))
    return 0.5 * x * (1.0 + jnp.tanh(0.7978845608028654 * (x + 0.044715 * x * x * x)))


def _layernorm(x, g, b):
    x = x.astype(jnp.float32)
    mean = jnp.mean(x, axis=-1, keepdims=True)
    var = jnp.mean(jnp.square(x - mean), axis=-1, keepdims=True)
    return (x - mean) * lax.rsqrt(var + LN_EPS) * g + b


# ---------------- fused transformer-block kernel ----------------
# One grid step == one batch element; all heads handled inside this step.

def _block_kernel(h_ref, m_ref,
                  ln1_g_ref, ln1_b_ref, wqkv_ref, bqkv_ref, wproj_ref, bproj_ref,
                  ln2_g_ref, ln2_b_ref, wfc_ref, bfc_ref, wmp_ref, bmp_ref,
                  o_ref):
    h = h_ref[...].astype(jnp.float32)                         # (S, H)
    S = h.shape[0]

    # ---- attention sub-block ----
    hn = _layernorm(h, ln1_g_ref[...], ln1_b_ref[...])
    qkv = jnp.dot(hn, wqkv_ref[...],
                  preferred_element_type=jnp.float32) + bqkv_ref[...]   # (S, 3H)

    # causal + padding mask, one select, shared across heads
    row = lax.broadcasted_iota(jnp.int32, (S, S), 0)
    col = lax.broadcasted_iota(jnp.int32, (S, S), 1)
    keep = (col <= row) & (m_ref[0] > 0.5)                     # (S,S) & (1,S)

    wproj = wproj_ref[...]                                     # (H, H)
    attn = jnp.zeros((S, HIDDEN), jnp.float32)
    for hd in range(N_HEADS):                                  # static unroll
        q = qkv[:, hd * HEAD_DIM:(hd + 1) * HEAD_DIM]
        k = qkv[:, HIDDEN + hd * HEAD_DIM:HIDDEN + (hd + 1) * HEAD_DIM]
        v = qkv[:, 2 * HIDDEN + hd * HEAD_DIM:2 * HIDDEN + (hd + 1) * HEAD_DIM]
        s = jnp.dot(q, k.T, preferred_element_type=jnp.float32) * ATTN_SCALE
        s = jnp.where(keep, s, jnp.float32(NEG_INF))           # single select
        s_max = jnp.max(s, axis=-1, keepdims=True)
        p = jnp.exp(s - s_max)
        denom = jnp.sum(p, axis=-1, keepdims=True)
        p = p * pl.reciprocal(denom, approx=True)              # EUP divide
        o_h = jnp.dot(p, v, preferred_element_type=jnp.float32)            # (S, D)
        # concat(heads) @ Wproj  ==  sum_h  o_h @ Wproj[h*D:(h+1)*D, :]
        attn = attn + jnp.dot(o_h, wproj[hd * HEAD_DIM:(hd + 1) * HEAD_DIM, :],
                              preferred_element_type=jnp.float32)
    h = h + attn + bproj_ref[...]                              # residual 1

    # ---- MLP sub-block ----
    hn = _layernorm(h, ln2_g_ref[...], ln2_b_ref[...])
    m1 = _gelu_new(jnp.dot(hn, wfc_ref[...],
                           preferred_element_type=jnp.float32) + bfc_ref[...])
    h = h + jnp.dot(m1, wmp_ref[...],
                    preferred_element_type=jnp.float32) + bmp_ref[...]     # residual 2

    o_ref[...] = h


def gpt_block(h, mask3, blk, B, S):
    full = lambda shape: pl.BlockSpec(shape, lambda b: tuple(0 for _ in shape))
    return pl.pallas_call(
        _block_kernel,
        out_shape=jax.ShapeDtypeStruct((B * S, HIDDEN), jnp.float32),
        grid=(B,),
        in_specs=[
            pl.BlockSpec((S, HIDDEN), lambda b: (b, 0)),        # h (per batch)
            pl.BlockSpec((1, 1, S), lambda b: (b, 0, 0)),       # mask (per batch)
            full((1, HIDDEN)), full((1, HIDDEN)),               # ln1 g, b
            full((HIDDEN, 3 * HIDDEN)), full((1, 3 * HIDDEN)),  # c_attn w, b
            full((HIDDEN, HIDDEN)), full((1, HIDDEN)),          # attn proj w, b
            full((1, HIDDEN)), full((1, HIDDEN)),               # ln2 g, b
            full((HIDDEN, 4 * HIDDEN)), full((1, 4 * HIDDEN)),  # c_fc w, b
            full((4 * HIDDEN, HIDDEN)), full((1, HIDDEN)),      # mlp proj w, b
        ],
        out_specs=pl.BlockSpec((S, HIDDEN), lambda b: (b, 0)),
        compiler_params=pltpu.CompilerParams(
            dimension_semantics=("parallel",)),
    )(h, mask3,
      blk["ln1_g"].reshape(1, HIDDEN), blk["ln1_b"].reshape(1, HIDDEN),
      blk["c_attn_w"], blk["c_attn_b"].reshape(1, 3 * HIDDEN),
      blk["attn_proj_w"], blk["attn_proj_b"].reshape(1, HIDDEN),
      blk["ln2_g"].reshape(1, HIDDEN), blk["ln2_b"].reshape(1, HIDDEN),
      blk["c_fc_w"], blk["c_fc_b"].reshape(1, 4 * HIDDEN),
      blk["mlp_proj_w"], blk["mlp_proj_b"].reshape(1, HIDDEN))


# ---------------- fused final LN + tied lm_head kernel ----------------

def _head_kernel(h_ref, g_ref, b_ref, wte_ref, o_ref):
    hn = _layernorm(h_ref[...], g_ref[...], b_ref[...])        # (S, H)
    # tied lm_head: h @ wte^T, transposed inside the kernel (no wrapper .T copy)
    o_ref[...] = jnp.dot(hn, wte_ref[...].T,
                         preferred_element_type=jnp.float32)   # (S, VOCAB) lane-dense


def lm_head(h, ln_g, ln_b, wte, B, S):
    full = lambda shape: pl.BlockSpec(shape, lambda b: tuple(0 for _ in shape))
    return pl.pallas_call(
        _head_kernel,
        out_shape=jax.ShapeDtypeStruct((B * S, VOCAB), jnp.float32),
        grid=(B,),
        in_specs=[
            pl.BlockSpec((S, HIDDEN), lambda b: (b, 0)),        # h (per batch)
            full((1, HIDDEN)), full((1, HIDDEN)),               # ln_f g, b
            full((VOCAB, HIDDEN)),                              # tied wte
        ],
        out_specs=pl.BlockSpec((S, VOCAB), lambda b: (b, 0)),
        compiler_params=pltpu.CompilerParams(
            dimension_semantics=("parallel",)),
    )(h, ln_g.reshape(1, HIDDEN), ln_b.reshape(1, HIDDEN), wte)


# ---------------- model params + forward ----------------

def init_params(key):
    std = 0.02
    keys = jax.random.split(key, 2 + N_LAYERS)
    params = {
        "wte": jax.random.normal(keys[0], (VOCAB, HIDDEN), jnp.float32) * std,
        "wpe": jax.random.normal(keys[1], (MAX_SEQ, HIDDEN), jnp.float32) * std,
        "ln_f_g": jnp.ones((HIDDEN,), jnp.float32),
        "ln_f_b": jnp.zeros((HIDDEN,), jnp.float32),
        "blocks": [],
    }
    for l in range(N_LAYERS):
        k = jax.random.split(keys[2 + l], 4)
        params["blocks"].append({
            "ln1_g": jnp.ones((HIDDEN,), jnp.float32),
            "ln1_b": jnp.zeros((HIDDEN,), jnp.float32),
            "c_attn_w": jax.random.normal(k[0], (HIDDEN, 3 * HIDDEN), jnp.float32) * std,
            "c_attn_b": jnp.zeros((3 * HIDDEN,), jnp.float32),
            "attn_proj_w": jax.random.normal(k[1], (HIDDEN, HIDDEN), jnp.float32) * std,
            "attn_proj_b": jnp.zeros((HIDDEN,), jnp.float32),
            "ln2_g": jnp.ones((HIDDEN,), jnp.float32),
            "ln2_b": jnp.zeros((HIDDEN,), jnp.float32),
            "c_fc_w": jax.random.normal(k[2], (HIDDEN, 4 * HIDDEN), jnp.float32) * std,
            "c_fc_b": jnp.zeros((4 * HIDDEN,), jnp.float32),
            "mlp_proj_w": jax.random.normal(k[3], (4 * HIDDEN, HIDDEN), jnp.float32) * std,
            "mlp_proj_b": jnp.zeros((HIDDEN,), jnp.float32),
        })
    return params


def gpt_lm_forward(params, input_ids, attention_mask):
    B, S = input_ids.shape
    # embedding gather + positional add: cheap one-time XLA glue
    pos = jnp.arange(S)
    h = params["wte"][input_ids] + params["wpe"][pos][None, :, :]   # (B, S, H)
    h = h.reshape(B * S, HIDDEN).astype(jnp.float32)
    mask3 = attention_mask.astype(jnp.float32).reshape(B, 1, S)

    for blk in params["blocks"]:
        h = gpt_block(h, mask3, blk, B, S)                      # one fused kernel / block

    logits = lm_head(h, params["ln_f_g"], params["ln_f_b"], params["wte"], B, S)
    return logits.reshape(B, S, VOCAB)


if __name__ == "__main__":
    key = jax.random.PRNGKey(0)
    pkey, ikey = jax.random.split(key)
    params = init_params(pkey)

    B, S = 2, MAX_SEQ
    input_ids = jax.random.randint(ikey, (B, S), 0, VOCAB, dtype=jnp.int32)
    attention_mask = jnp.ones((B, S), jnp.float32)

    logits = jax.jit(gpt_lm_forward)(params, input_ids, attention_mask)
    jax.block_until_ready(logits)
    assert logits.shape == (B, S, VOCAB) and logits.dtype == jnp.float32
    assert bool(jnp.isfinite(logits).all())
    print("KERNEL_OK")
</pallas_src>

<mosaic_0001>
module attributes {stable_mosaic.version = 11 : i64} {
  func.func @_head_kernel(%arg0: i32, %arg1: memref<8x32xf32, #tpu.memory_space<vmem>>, %arg2: memref<1x32xf32, #tpu.memory_space<vmem>>, %arg3: memref<1x32xf32, #tpu.memory_space<vmem>>, %arg4: memref<128x32xf32, #tpu.memory_space<vmem>>, %arg5: memref<8x128xf32, #tpu.memory_space<vmem>>) attributes {dimension_semantics = [#tpu.dimension_semantics<parallel>], iteration_bounds = array<i64: 2>, scalar_prefetch = 0 : i64, scratch_operands = 0 : i64, tpu.core_type = #tpu.core_type<tc>, window_params = [{transform_indices = @transform_0, window_bounds = array<i64: 8, 32>}, {pipeline_mode = #tpu.pipeline_mode<synchronous>, transform_indices = @transform_1, window_bounds = array<i64: 1, 32>}, {pipeline_mode = #tpu.pipeline_mode<synchronous>, transform_indices = @transform_2, window_bounds = array<i64: 1, 32>}, {pipeline_mode = #tpu.pipeline_mode<synchronous>, transform_indices = @transform_3, window_bounds = array<i64: 128, 32>}, {transform_indices = @transform_4, window_bounds = array<i64: 8, 128>}]} {
    %c0 = arith.constant 0 : index
    %c0_0 = arith.constant 0 : index
    %0 = vector.load %arg1[%c0, %c0_0] : memref<8x32xf32, #tpu.memory_space<vmem>>, vector<8x32xf32>
    %c0_1 = arith.constant 0 : index
    %c0_2 = arith.constant 0 : index
    %1 = vector.load %arg2[%c0_1, %c0_2] : memref<1x32xf32, #tpu.memory_space<vmem>>, vector<1x32xf32>
    %c0_3 = arith.constant 0 : index
    %c0_4 = arith.constant 0 : index
    %2 = vector.load %arg3[%c0_3, %c0_4] : memref<1x32xf32, #tpu.memory_space<vmem>>, vector<1x32xf32>
    %cst = arith.constant dense<0.000000e+00> : vector<8xf32>
    %3 = vector.multi_reduction <add>, %0, %cst [1] : vector<8x32xf32> to vector<8xf32>
    %4 = vector.shape_cast %3 : vector<8xf32> to vector<8x1xf32>
    %cst_5 = arith.constant 3.200000e+01 : f32
    %5 = vector.broadcast %cst_5 : f32 to vector<8x1xf32>
    %6 = arith.divf %4, %5 : vector<8x1xf32>
    %7 = vector.broadcast %6 : vector<8x1xf32> to vector<8x32xf32>
    %8 = arith.subf %0, %7 : vector<8x32xf32>
    %9 = arith.mulf %8, %8 : vector<8x32xf32>
    %cst_6 = arith.constant dense<0.000000e+00> : vector<8xf32>
    %10 = vector.multi_reduction <add>, %9, %cst_6 [1] : vector<8x32xf32> to vector<8xf32>
    %11 = vector.shape_cast %10 : vector<8xf32> to vector<8x1xf32>
    %cst_7 = arith.constant 3.200000e+01 : f32
    %12 = vector.broadcast %cst_7 : f32 to vector<8x1xf32>
    %13 = arith.divf %11, %12 : vector<8x1xf32>
    %14 = vector.broadcast %6 : vector<8x1xf32> to vector<8x32xf32>
    %15 = arith.subf %0, %14 : vector<8x32xf32>
    %cst_8 = arith.constant 9.99999974E-6 : f32
    %16 = vector.broadcast %cst_8 : f32 to vector<8x1xf32>
    %17 = arith.addf %13, %16 : vector<8x1xf32>
    %18 = math.rsqrt %17 : vector<8x1xf32>
    %19 = vector.broadcast %18 : vector<8x1xf32> to vector<8x32xf32>
    %20 = arith.mulf %15, %19 : vector<8x32xf32>
    %21 = vector.broadcast %1 : vector<1x32xf32> to vector<8x32xf32>
    %22 = arith.mulf %20, %21 : vector<8x32xf32>
    %23 = vector.broadcast %2 : vector<1x32xf32> to vector<8x32xf32>
    %24 = arith.addf %22, %23 : vector<8x32xf32>
    %c0_9 = arith.constant 0 : index
    %c0_10 = arith.constant 0 : index
    %25 = vector.load %arg4[%c0_9, %c0_10] : memref<128x32xf32, #tpu.memory_space<vmem>>, vector<128x32xf32>
    %26 = tpu.transpose %25, [1, 0] : vector<128x32xf32> -> vector<32x128xf32>
    %cst_11 = arith.constant dense<0.000000e+00> : vector<8x128xf32>
    %27 = tpu.matmul %24, %26, %cst_11 {dimension_numbers = #tpu.dot_dimension_numbers<[1], [0], [0], [1], [0, 0, 1, 1], [], []>} : vector<8x32xf32>, vector<32x128xf32>, vector<8x128xf32> -> vector<8x128xf32>
    %c0_12 = arith.constant 0 : index
    %c0_13 = arith.constant 0 : index
    %28 = vector.load %arg5[%c0_12, %c0_13] : memref<8x128xf32, #tpu.memory_space<vmem>>, vector<8x128xf32>
    tpu.vector_store %arg5[%c0_12, %c0_13], %27 {strides = array<i32>} : memref<8x128xf32, #tpu.memory_space<vmem>>, vector<8x128xf32>,
    return
  }
  func.func @transform_0(%arg0: i32) -> (i32, i32) {
    %c0_i32 = arith.constant 0 : i32
    %c0_i32_0 = arith.constant 0 : i32
    return %arg0, %c0_i32 : i32, i32
  }
  func.func @transform_1(%arg0: i32) -> (i32, i32) {
    %c0_i32 = arith.constant 0 : i32
    %c0_i32_0 = arith.constant 0 : i32
    %c0_i32_1 = arith.constant 0 : i32
    return %c0_i32, %c0_i32_0 : i32, i32
  }
  func.func @transform_2(%arg0: i32) -> (i32, i32) {
    %c0_i32 = arith.constant 0 : i32
    %c0_i32_0 = arith.constant 0 : i32
    %c0_i32_1 = arith.constant 0 : i32
    return %c0_i32, %c0_i32_0 : i32, i32
  }
  func.func @transform_3(%arg0: i32) -> (i32, i32) {
    %c0_i32 = arith.constant 0 : i32
    %c0_i32_0 = arith.constant 0 : i32
    %c0_i32_1 = arith.constant 0 : i32
    return %c0_i32, %c0_i32_0 : i32, i32
  }
  func.func @transform_4(%arg0: i32) -> (i32, i32) {
    %c0_i32 = arith.constant 0 : i32
    %c0_i32_0 = arith.constant 0 : i32
    return %arg0, %c0_i32 : i32, i32
  }
}

module attributes {stable_mosaic.version = 11 : i64} {
  func.func @_block_kernel(%arg0: i32, %arg1: memref<8x32xf32, #tpu.memory_space<vmem>>, %arg2: memref<1x1x8xf32, #tpu.memory_space<vmem>>, %arg3: memref<1x32xf32, #tpu.memory_space<vmem>>, %arg4: memref<1x32xf32, #tpu.memory_space<vmem>>, %arg5: memref<32x96xf32, #tpu.memory_space<vmem>>, %arg6: memref<1x96xf32, #tpu.memory_space<vmem>>, %arg7: memref<32x32xf32, #tpu.memory_space<vmem>>, %arg8: memref<1x32xf32, #tpu.memory_space<vmem>>, %arg9: memref<1x32xf32, #tpu.memory_space<vmem>>, %arg10: memref<1x32xf32, #tpu.memory_space<vmem>>, %arg11: memref<32x128xf32, #tpu.memory_space<vmem>>, %arg12: memref<1x128xf32, #tpu.memory_space<vmem>>, %arg13: memref<128x32xf32, #tpu.memory_space<vmem>>, %arg14: memref<1x32xf32, #tpu.memory_space<vmem>>, %arg15: memref<8x32xf32, #tpu.memory_space<vmem>>) attributes {dimension_semantics = [#tpu.dimension_semantics<parallel>], iteration_bounds = array<i64: 2>, scalar_prefetch = 0 : i64, scratch_operands = 0 : i64, tpu.core_type = #tpu.core_type<tc>, window_params = [{transform_indices = @transform_0, window_bounds = array<i64: 8, 32>}, {transform_indices = @transform_1, window_bounds = array<i64: 1, 1, 8>}, {pipeline_mode = #tpu.pipeline_mode<synchronous>, transform_indices = @transform_2, window_bounds = array<i64: 1, 32>}, {pipeline_mode = #tpu.pipeline_mode<synchronous>, transform_indices = @transform_3, window_bounds = array<i64: 1, 32>}, {pipeline_mode = #tpu.pipeline_mode<synchronous>, transform_indices = @transform_4, window_bounds = array<i64: 32, 96>}, {pipeline_mode = #tpu.pipeline_mode<synchronous>, transform_indices = @transform_5, window_bounds = array<i64: 1, 96>}, {pipeline_mode = #tpu.pipeline_mode<synchronous>, transform_indices = @transform_6, window_bounds = array<i64: 32, 32>}, {pipeline_mode = #tpu.pipeline_mode<synchronous>, transform_indices = @transform_7, window_bounds = array<i64: 1, 32>}, {pipeline_mode = #tpu.pipeline_mode<synchronous>, transform_indices = @transform_8, window_bounds = array<i64: 1, 32>}, {pipeline_mode = #tpu.pipeline_mode<synchronous>, transform_indices = @transform_9, window_bounds = array<i64: 1, 32>}, {pipeline_mode = #tpu.pipeline_mode<synchronous>, transform_indices = @transform_10, window_bounds = array<i64: 32, 128>}, {pipeline_mode = #tpu.pipeline_mode<synchronous>, transform_indices = @transform_11, window_bounds = array<i64: 1, 128>}, {pipeline_mode = #tpu.pipeline_mode<synchronous>, transform_indices = @transform_12, window_bounds = array<i64: 128, 32>}, {pipeline_mode = #tpu.pipeline_mode<synchronous>, transform_indices = @transform_13, window_bounds = array<i64: 1, 32>}, {transform_indices = @transform_14, window_bounds = array<i64: 8, 32>}]} {
    %c0 = arith.constant 0 : index
    %c0_0 = arith.constant 0 : index
    %0 = vector.load %arg1[%c0, %c0_0] : memref<8x32xf32, #tpu.memory_space<vmem>>, vector<8x32xf32>
    %c0_1 = arith.constant 0 : index
    %c0_2 = arith.constant 0 : index
    %1 = vector.load %arg3[%c0_1, %c0_2] : memref<1x32xf32, #tpu.memory_space<vmem>>, vector<1x32xf32>
    %c0_3 = arith.constant 0 : index
    %c0_4 = arith.constant 0 : index
    %2 = vector.load %arg4[%c0_3, %c0_4] : memref<1x32xf32, #tpu.memory_space<vmem>>, vector<1x32xf32>
    %cst = arith.constant dense<0.000000e+00> : vector<8xf32>
    %3 = vector.multi_reduction <add>, %0, %cst [1] : vector<8x32xf32> to vector<8xf32>
    %4 = vector.shape_cast %3 : vector<8xf32> to vector<8x1xf32>
    %cst_5 = arith.constant 3.200000e+01 : f32
    %5 = vector.broadcast %cst_5 : f32 to vector<8x1xf32>
    %6 = arith.divf %4, %5 : vector<8x1xf32>
    %7 = vector.broadcast %6 : vector<8x1xf32> to vector<8x32xf32>
    %8 = arith.subf %0, %7 : vector<8x32xf32>
    %9 = arith.mulf %8, %8 : vector<8x32xf32>
    %cst_6 = arith.constant dense<0.000000e+00> : vector<8xf32>
    %10 = vector.multi_reduction <add>, %9, %cst_6 [1] : vector<8x32xf32> to vector<8xf32>
    %11 = vector.shape_cast %10 : vector<8xf32> to vector<8x1xf32>
    %cst_7 = arith.constant 3.200000e+01 : f32
    %12 = vector.broadcast %cst_7 : f32 to vector<8x1xf32>
    %13 = arith.divf %11, %12 : vector<8x1xf32>
    %14 = vector.broadcast %6 : vector<8x1xf32> to vector<8x32xf32>
    %15 = arith.subf %0, %14 : vector<8x32xf32>
    %cst_8 = arith.constant 9.99999974E-6 : f32
    %16 = vector.broadcast %cst_8 : f32 to vector<8x1xf32>
    %17 = arith.addf %13, %16 : vector<8x1xf32>
    %18 = math.rsqrt %17 : vector<8x1xf32>
    %19 = vector.broadcast %18 : vector<8x1xf32> to vector<8x32xf32>
    %20 = arith.mulf %15, %19 : vector<8x32xf32>
    %21 = vector.broadcast %1 : vector<1x32xf32> to vector<8x32xf32>
    %22 = arith.mulf %20, %21 : vector<8x32xf32>
    %23 = vector.broadcast %2 : vector<1x32xf32> to vector<8x32xf32>
    %24 = arith.addf %22, %23 : vector<8x32xf32>
    %c0_9 = arith.constant 0 : index
    %c0_10 = arith.constant 0 : index
    %25 = vector.load %arg5[%c0_9, %c0_10] : memref<32x96xf32, #tpu.memory_space<vmem>>, vector<32x96xf32>
    %cst_11 = arith.constant dense<0.000000e+00> : vector<8x96xf32>
    %26 = tpu.matmul %24, %25, %cst_11 {dimension_numbers = #tpu.dot_dimension_numbers<[1], [0], [0], [1], [0, 0, 1, 1], [], []>} : vector<8x32xf32>, vector<32x96xf32>, vector<8x96xf32> -> vector<8x96xf32>
    %c0_12 = arith.constant 0 : index
    %c0_13 = arith.constant 0 : index
    %27 = vector.load %arg6[%c0_12, %c0_13] : memref<1x96xf32, #tpu.memory_space<vmem>>, vector<1x96xf32>
    %28 = vector.broadcast %27 : vector<1x96xf32> to vector<8x96xf32>
    %29 = arith.addf %26, %28 : vector<8x96xf32>
    %30 = tpu.iota {dimensions = array<i32: 0>} : vector<8x8xi32>
    %31 = tpu.iota {dimensions = array<i32: 1>} : vector<8x8xi32>
    %32 = arith.cmpi sle, %31, %30 : vector<8x8xi32>
    %c0_14 = arith.constant 0 : index
    %c0_15 = arith.constant 0 : index
    %c0_16 = arith.constant 0 : index
    %33 = vector.load %arg2[%c0_14, %c0_15, %c0_16] : memref<1x1x8xf32, #tpu.memory_space<vmem>>, vector<1x1x8xf32>
    %34 = vector.shape_cast %33 : vector<1x1x8xf32> to vector<1x8xf32>
    %cst_17 = arith.constant 5.000000e-01 : f32
    %35 = vector.broadcast %cst_17 : f32 to vector<1x8xf32>
    %36 = arith.cmpf ogt, %34, %35 : vector<1x8xf32>
    %37 = vector.broadcast %36 : vector<1x8xi1> to vector<8x8xi1>
    %38 = arith.andi %32, %37 : vector<8x8xi1>
    %c0_18 = arith.constant 0 : index
    %c0_19 = arith.constant 0 : index
    %39 = vector.load %arg7[%c0_18, %c0_19] : memref<32x32xf32, #tpu.memory_space<vmem>>, vector<32x32xf32>
    %cst_20 = arith.constant 0.000000e+00 : f32
    %40 = vector.broadcast %cst_20 : f32 to vector<8x32xf32>
    %41 = vector.extract_strided_slice %29 {offsets = [0, 0], sizes = [8, 16], strides = [1, 1]} : vector<8x96xf32> to vector<8x16xf32>
    %42 = vector.extract_strided_slice %29 {offsets = [0, 32], sizes = [8, 16], strides = [1, 1]} : vector<8x96xf32> to vector<8x16xf32>
    %43 = vector.extract_strided_slice %29 {offsets = [0, 64], sizes = [8, 16], strides = [1, 1]} : vector<8x96xf32> to vector<8x16xf32>
    %44 = tpu.transpose %42, [1, 0] : vector<8x16xf32> -> vector<16x8xf32>
    %cst_21 = arith.constant dense<0.000000e+00> : vector<8x8xf32>
    %45 = tpu.matmul %41, %44, %cst_21 {dimension_numbers = #tpu.dot_dimension_numbers<[1], [0], [0], [1], [0, 0, 1, 1], [], []>} : vector<8x16xf32>, vector<16x8xf32>, vector<8x8xf32> -> vector<8x8xf32>
    %cst_22 = arith.constant 2.500000e-01 : f32
    %46 = vector.broadcast %cst_22 : f32 to vector<8x8xf32>
    %47 = arith.mulf %45, %46 : vector<8x8xf32>
    %cst_23 = arith.constant -1.000000e+09 : f32
    %48 = vector.broadcast %cst_23 : f32 to vector<8x8xf32>
    %49 = arith.select %38, %47, %48 : vector<8x8xi1>, vector<8x8xf32>
    %cst_24 = arith.constant dense<0xFF800000> : vector<8xf32>
    %50 = vector.multi_reduction <maximumf>, %49, %cst_24 [1] : vector<8x8xf32> to vector<8xf32>
    %51 = vector.shape_cast %50 : vector<8xf32> to vector<8x1xf32>
    %52 = vector.broadcast %51 : vector<8x1xf32> to vector<8x8xf32>
    %53 = arith.subf %49, %52 : vector<8x8xf32>
    %54 = math.exp %53 : vector<8x8xf32>
    %cst_25 = arith.constant dense<0.000000e+00> : vector<8xf32>
    %55 = vector.multi_reduction <add>, %54, %cst_25 [1] : vector<8x8xf32> to vector<8xf32>
    %56 = vector.shape_cast %55 : vector<8xf32> to vector<8x1xf32>
    %57 = tpu.reciprocal %56 {approx = true} : vector<8x1xf32> -> vector<8x1xf32>
    %58 = vector.broadcast %57 : vector<8x1xf32> to vector<8x8xf32>
    %59 = arith.mulf %54, %58 : vector<8x8xf32>
    %cst_26 = arith.constant dense<0.000000e+00> : vector<8x16xf32>
    %60 = tpu.matmul %59, %43, %cst_26 {dimension_numbers = #tpu.dot_dimension_numbers<[1], [0], [0], [1], [0, 0, 1, 1], [], []>} : vector<8x8xf32>, vector<8x16xf32>, vector<8x16xf32> -> vector<8x16xf32>
    %61 = vector.extract_strided_slice %39 {offsets = [0, 0], sizes = [16, 32], strides = [1, 1]} : vector<32x32xf32> to vector<16x32xf32>
    %cst_27 = arith.constant dense<0.000000e+00> : vector<8x32xf32>
    %62 = tpu.matmul %60, %61, %cst_27 {dimension_numbers = #tpu.dot_dimension_numbers<[1], [0], [0], [1], [0, 0, 1, 1], [], []>} : vector<8x16xf32>, vector<16x32xf32>, vector<8x32xf32> -> vector<8x32xf32>
    %63 = arith.addf %40, %62 : vector<8x32xf32>
    %64 = vector.extract_strided_slice %29 {offsets = [0, 16], sizes = [8, 16], strides = [1, 1]} : vector<8x96xf32> to vector<8x16xf32>
    %65 = vector.extract_strided_slice %29 {offsets = [0, 48], sizes = [8, 16], strides = [1, 1]} : vector<8x96xf32> to vector<8x16xf32>
    %66 = vector.extract_strided_slice %29 {offsets = [0, 80], sizes = [8, 16], strides = [1, 1]} : vector<8x96xf32> to vector<8x16xf32>
    %67 = tpu.transpose %65, [1, 0] : vector<8x16xf32> -> vector<16x8xf32>
    %cst_28 = arith.constant dense<0.000000e+00> : vector<8x8xf32>
    %68 = tpu.matmul %64, %67, %cst_28 {dimension_numbers = #tpu.dot_dimension_numbers<[1], [0], [0], [1], [0, 0, 1, 1], [], []>} : vector<8x16xf32>, vector<16x8xf32>, vector<8x8xf32> -> vector<8x8xf32>
    %cst_29 = arith.constant 2.500000e-01 : f32
    %69 = vector.broadcast %cst_29 : f32 to vector<8x8xf32>
    %70 = arith.mulf %68, %69 : vector<8x8xf32>
    %cst_30 = arith.constant -1.000000e+09 : f32
    %71 = vector.broadcast %cst_30 : f32 to vector<8x8xf32>
    %72 = arith.select %38, %70, %71 : vector<8x8xi1>, vector<8x8xf32>
    %cst_31 = arith.constant dense<0xFF800000> : vector<8xf32>
    %73 = vector.multi_reduction <maximumf>, %72, %cst_31 [1] : vector<8x8xf32> to vector<8xf32>
    %74 = vector.shape_cast %73 : vector<8xf32> to vector<8x1xf32>
    %75 = vector.broadcast %74 : vector<8x1xf32> to vector<8x8xf32>
    %76 = arith.subf %72, %75 : vector<8x8xf32>
    %77 = math.exp %76 : vector<8x8xf32>
    %cst_32 = arith.constant dense<0.000000e+00> : vector<8xf32>
    %78 = vector.multi_reduction <add>, %77, %cst_32 [1] : vector<8x8xf32> to vector<8xf32>
    %79 = vector.shape_cast %78 : vector<8xf32> to vector<8x1xf32>
    %80 = tpu.reciprocal %79 {approx = true} : vector<8x1xf32> -> vector<8x1xf32>
    %81 = vector.broadcast %80 : vector<8x1xf32> to vector<8x8xf32>
    %82 = arith.mulf %77, %81 : vector<8x8xf32>
    %cst_33 = arith.constant dense<0.000000e+00> : vector<8x16xf32>
    %83 = tpu.matmul %82, %66, %cst_33 {dimension_numbers = #tpu.dot_dimension_numbers<[1], [0], [0], [1], [0, 0, 1, 1], [], []>} : vector<8x8xf32>, vector<8x16xf32>, vector<8x16xf32> -> vector<8x16xf32>
    %84 = vector.extract_strided_slice %39 {offsets = [16, 0], sizes = [16, 32], strides = [1, 1]} : vector<32x32xf32> to vector<16x32xf32>
    %cst_34 = arith.constant dense<0.000000e+00> : vector<8x32xf32>
    %85 = tpu.matmul %83, %84, %cst_34 {dimension_numbers = #tpu.dot_dimension_numbers<[1], [0], [0], [1], [0, 0, 1, 1], [], []>} : vector<8x16xf32>, vector<16x32xf32>, vector<8x32xf32> -> vector<8x32xf32>
    %86 = arith.addf %63, %85 : vector<8x32xf32>
    %87 = arith.addf %0, %86 : vector<8x32xf32>
    %c0_35 = arith.constant 0 : index
    %c0_36 = arith.constant 0 : index
    %88 = vector.load %arg8[%c0_35, %c0_36] : memref<1x32xf32, #tpu.memory_space<vmem>>, vector<1x32xf32>
    %89 = vector.broadcast %88 : vector<1x32xf32> to vector<8x32xf32>
    %90 = arith.addf %87, %89 : vector<8x32xf32>
    %c0_37 = arith.constant 0 : index
    %c0_38 = arith.constant 0 : index
    %91 = vector.load %arg9[%c0_37, %c0_38] : memref<1x32xf32, #tpu.memory_space<vmem>>, vector<1x32xf32>
    %c0_39 = arith.constant 0 : index
    %c0_40 = arith.constant 0 : index
    %92 = vector.load %arg10[%c0_39, %c0_40] : memref<1x32xf32, #tpu.memory_space<vmem>>, vector<1x32xf32>
    %cst_41 = arith.constant dense<0.000000e+00> : vector<8xf32>
    %93 = vector.multi_reduction <add>, %90, %cst_41 [1] : vector<8x32xf32> to vector<8xf32>
    %94 = vector.shape_cast %93 : vector<8xf32> to vector<8x1xf32>
    %cst_42 = arith.constant 3.200000e+01 : f32
    %95 = vector.broadcast %cst_42 : f32 to vector<8x1xf32>
    %96 = arith.divf %94, %95 : vector<8x1xf32>
    %97 = vector.broadcast %96 : vector<8x1xf32> to vector<8x32xf32>
    %98 = arith.subf %90, %97 : vector<8x32xf32>
    %99 = arith.mulf %98, %98 : vector<8x32xf32>
    %cst_43 = arith.constant dense<0.000000e+00> : vector<8xf32>
    %100 = vector.multi_reduction <add>, %99, %cst_43 [1] : vector<8x32xf32> to vector<8xf32>
    %101 = vector.shape_cast %100 : vector<8xf32> to vector<8x1xf32>
    %cst_44 = arith.constant 3.200000e+01 : f32
    %102 = vector.broadcast %cst_44 : f32 to vector<8x1xf32>
    %103 = arith.divf %101, %102 : vector<8x1xf32>
    %104 = vector.broadcast %96 : vector<8x1xf32> to vector<8x32xf32>
    %105 = arith.subf %90, %104 : vector<8x32xf32>
    %cst_45 = arith.constant 9.99999974E-6 : f32
    %106 = vector.broadcast %cst_45 : f32 to vector<8x1xf32>
    %107 = arith.addf %103, %106 : vector<8x1xf32>
    %108 = math.rsqrt %107 : vector<8x1xf32>
    %109 = vector.broadcast %108 : vector<8x1xf32> to vector<8x32xf32>
    %110 = arith.mulf %105, %109 : vector<8x32xf32>
    %111 = vector.broadcast %91 : vector<1x32xf32> to vector<8x32xf32>
    %112 = arith.mulf %110, %111 : vector<8x32xf32>
    %113 = vector.broadcast %92 : vector<1x32xf32> to vector<8x32xf32>
    %114 = arith.addf %112, %113 : vector<8x32xf32>
    %c0_46 = arith.constant 0 : index
    %c0_47 = arith.constant 0 : index
    %115 = vector.load %arg11[%c0_46, %c0_47] : memref<32x128xf32, #tpu.memory_space<vmem>>, vector<32x128xf32>
    %cst_48 = arith.constant dense<0.000000e+00> : vector<8x128xf32>
    %116 = tpu.matmul %114, %115, %cst_48 {dimension_numbers = #tpu.dot_dimension_numbers<[1], [0], [0], [1], [0, 0, 1, 1], [], []>} : vector<8x32xf32>, vector<32x128xf32>, vector<8x128xf32> -> vector<8x128xf32>
    %c0_49 = arith.constant 0 : index
    %c0_50 = arith.constant 0 : index
    %117 = vector.load %arg12[%c0_49, %c0_50] : memref<1x128xf32, #tpu.memory_space<vmem>>, vector<1x128xf32>
    %118 = vector.broadcast %117 : vector<1x128xf32> to vector<8x128xf32>
    %119 = arith.addf %116, %118 : vector<8x128xf32>
    %cst_51 = arith.constant 5.000000e-01 : f32
    %120 = vector.broadcast %cst_51 : f32 to vector<8x128xf32>
    %121 = arith.mulf %120, %119 : vector<8x128xf32>
    %cst_52 = arith.constant 4.471500e-02 : f32
    %122 = vector.broadcast %cst_52 : f32 to vector<8x128xf32>
    %123 = arith.mulf %122, %119 : vector<8x128xf32>
    %124 = arith.mulf %123, %119 : vector<8x128xf32>
    %125 = arith.mulf %124, %119 : vector<8x128xf32>
    %126 = arith.addf %119, %125 : vector<8x128xf32>
    %cst_53 = arith.constant 0.797884583 : f32
    %127 = vector.broadcast %cst_53 : f32 to vector<8x128xf32>
    %128 = arith.mulf %127, %126 : vector<8x128xf32>
    %129 = math.tanh %128 : vector<8x128xf32>
    %cst_54 = arith.constant 1.000000e+00 : f32
    %130 = vector.broadcast %cst_54 : f32 to vector<8x128xf32>
    %131 = arith.addf %130, %129 : vector<8x128xf32>
    %132 = arith.mulf %121, %131 : vector<8x128xf32>
    %c0_55 = arith.constant 0 : index
    %c0_56 = arith.constant 0 : index
    %133 = vector.load %arg13[%c0_55, %c0_56] : memref<128x32xf32, #tpu.memory_space<vmem>>, vector<128x32xf32>
    %cst_57 = arith.constant dense<0.000000e+00> : vector<8x32xf32>
    %134 = tpu.matmul %132, %133, %cst_57 {dimension_numbers = #tpu.dot_dimension_numbers<[1], [0], [0], [1], [0, 0, 1, 1], [], []>} : vector<8x128xf32>, vector<128x32xf32>, vector<8x32xf32> -> vector<8x32xf32>
    %135 = arith.addf %90, %134 : vector<8x32xf32>
    %c0_58 = arith.constant 0 : index
    %c0_59 = arith.constant 0 : index
    %136 = vector.load %arg14[%c0_58, %c0_59] : memref<1x32xf32, #tpu.memory_space<vmem>>, vector<1x32xf32>
    %137 = vector.broadcast %136 : vector<1x32xf32> to vector<8x32xf32>
    %138 = arith.addf %135, %137 : vector<8x32xf32>
    %c0_60 = arith.constant 0 : index
    %c0_61 = arith.constant 0 : index
    %139 = vector.load %arg15[%c0_60, %c0_61] : memref<8x32xf32, #tpu.memory_space<vmem>>, vector<8x32xf32>
    tpu.vector_store %arg15[%c0_60, %c0_61], %138 {strides = array<i32>} : memref<8x32xf32, #tpu.memory_space<vmem>>, vector<8x32xf32>,
    return
  }
  func.func @transform_0(%arg0: i32) -> (i32, i32) {
    %c0_i32 = arith.constant 0 : i32
    %c0_i32_0 = arith.constant 0 : i32
    return %arg0, %c0_i32 : i32, i32
  }
  func.func @transform_1(%arg0: i32) -> (i32, i32, i32) {
    %c0_i32 = arith.constant 0 : i32
    %c0_i32_0 = arith.constant 0 : i32
    %c0_i32_1 = arith.constant 0 : i32
    return %arg0, %c0_i32, %c0_i32_0 : i32, i32, i32
  }
  func.func @transform_2(%arg0: i32) -> (i32, i32) {
    %c0_i32 = arith.constant 0 : i32
    %c0_i32_0 = arith.constant 0 : i32
    %c0_i32_1 = arith.constant 0 : i32
    return %c0_i32, %c0_i32_0 : i32, i32
  }
  func.func @transform_3(%arg0: i32) -> (i32, i32) {
    %c0_i32 = arith.constant 0 : i32
    %c0_i32_0 = arith.constant 0 : i32
    %c0_i32_1 = arith.constant 0 : i32
    return %c0_i32, %c0_i32_0 : i32, i32
  }
  func.func @transform_4(%arg0: i32) -> (i32, i32) {
    %c0_i32 = arith.constant 0 : i32
    %c0_i32_0 = arith.constant 0 : i32
    %c0_i32_1 = arith.constant 0 : i32
    return %c0_i32, %c0_i32_0 : i32, i32
  }
  func.func @transform_5(%arg0: i32) -> (i32, i32) {
    %c0_i32 = arith.constant 0 : i32
    %c0_i32_0 = arith.constant 0 : i32
    %c0_i32_1 = arith.constant 0 : i32
    return %c0_i32, %c0_i32_0 : i32, i32
  }
  func.func @transform_6(%arg0: i32) -> (i32, i32) {
    %c0_i32 = arith.constant 0 : i32
    %c0_i32_0 = arith.constant 0 : i32
    %c0_i32_1 = arith.constant 0 : i32
    return %c0_i32, %c0_i32_0 : i32, i32
  }
  func.func @transform_7(%arg0: i32) -> (i32, i32) {
    %c0_i32 = arith.constant 0 : i32
    %c0_i32_0 = arith.constant 0 : i32
    %c0_i32_1 = arith.constant 0 : i32
    return %c0_i32, %c0_i32_0 : i32, i32
  }
  func.func @transform_8(%arg0: i32) -> (i32, i32) {
    %c0_i32 = arith.constant 0 : i32
    %c0_i32_0 = arith.constant 0 : i32
    %c0_i32_1 = arith.constant 0 : i32
    return %c0_i32, %c0_i32_0 : i32, i32
  }
  func.func @transform_9(%arg0: i32) -> (i32, i32) {
    %c0_i32 = arith.constant 0 : i32
    %c0_i32_0 = arith.constant 0 : i32
    %c0_i32_1 = arith.constant 0 : i32
    return %c0_i32, %c0_i32_0 : i32, i32
  }
  func.func @transform_10(%arg0: i32) -> (i32, i32) {
    %c0_i32 = arith.constant 0 : i32
    %c0_i32_0 = arith.constant 0 : i32
    %c0_i32_1 = arith.constant 0 : i32
    return %c0_i32, %c0_i32_0 : i32, i32
  }
  func.func @transform_11(%arg0: i32) -> (i32, i32) {
    %c0_i32 = arith.constant 0 : i32
    %c0_i32_0 = arith.constant 0 : i32
    %c0_i32_1 = arith.constant 0 : i32
    return %c0_i32, %c0_i32_0 : i32, i32
  }
  func.func @transform_12(%arg0: i32) -> (i32, i32) {
    %c0_i32 = arith.constant 0 : i32
    %c0_i32_0 = arith.constant 0 : i32
    %c0_i32_1 = arith.constant 0 : i32
    return %c0_i32, %c0_i32_0 : i32, i32
  }
  func.func @transform_13(%arg0: i32) -> (i32, i32) {
    %c0_i32 = arith.constant 0 : i32
    %c0_i32_0 = arith.constant 0 : i32
    %c0_i32_1 = arith.constant 0 : i32
    return %c0_i32, %c0_i32_0 : i32, i32
  }
  func.func @transform_14(%arg0: i32) -> (i32, i32) {
    %c0_i32 = arith.constant 0 : i32
    %c0_i32_0 = arith.constant 0 : i32
    return %arg0, %c0_i32 : i32, i32
  }
}

</mosaic_0001>

<llo_original>
// kernel: gpt_lm_forward.5
$region0: #{gpt_lm_forward.5}
  #allocation0 [shape = 'u32[]', space=smem, size = 0x4, offset = 0x4, fixed_abs, tag = 'smem constant byte address 0x4 - core index']
  #allocation1 [shape = 'u32[144,128]{1,0:T(1,128)}', space=vmem, size = 0x12000, scoped, tag = 'internal scratch']
  %s0 = inlined_call_operand.vmem [shape: f32[16,32], index: 0, kind: input, shape index: {}]
  %s1 = inlined_call_operand.vmem [shape: f32[1,32], index: 1, kind: input, shape index: {}]
  %s2 = inlined_call_operand.vmem [shape: f32[1,32], index: 2, kind: input, shape index: {}]
  %s3 = inlined_call_operand.vmem [shape: f32[128,32], index: 3, kind: input, shape index: {}]
  %s4 = inlined_call_operand.hbm [shape: f32[16,128], index: 4, kind: output, shape index: {}]
  %s5 = sld [smem:[#allocation0]]
  $region49: #{gpt_lm_forward.5} parent=0
    _
  %s7 = ssub.s32 1, %s5
  %s8 = scalar_select 0, %s7, %s5
  $region1: #{gpt_lm_forward.5} parent=0
    #allocation2 [shape = 'u8[8192]{0}', space=vmem, size = 0x2000, scoped, tag = 'output window, operand 0']
    #allocation3 [shape = 's32[2]{0}', space=sflag, size = 0x8, scoped, tag = 'scoped memory for gpt_lm_forward.5']
    %9 = vsyncpa [#allocation3], 0
    %s10 = scalar_lea.sflag [#allocation3], 1
    %11 = vsyncpa %s10, 0
    loop: start=0, step=1, limit=4
    $region2: #{gpt_lm_forward.5} parent=1 // loop_pre_header
      _
    $region3: #{gpt_lm_forward.5} parent=1 // loop_header
      %s13 = sphi 0, %s17
      %p14 = scmp.ge.s32.totalorder %s13, 4
      %s23 = sphi 0, %s25
      %s26 = sphi 0, %s23
      %s27 = sphi 0, %s26
      %s43 = sphi 0, %s27
      %s47 = sphi 0, %s47
      %s49 = sphi 0, %s47
      %s50 = sphi 0, %s49
      %s64 = sphi 0, %s50
      %s68 = sphi 0, %s68
      %s70 = sphi 0, %s68
      %s71 = sphi 0, %s70
      %s85 = sphi 0, %s71
      %s89 = sphi 0, %s89
      %s91 = sphi 0, %s89
      %s92 = sphi 0, %s91
      %s106 = sphi 0, %s92
      %s112 = sphi 0, %s114
      %s115 = sphi 0, %s112
      %s116 = sphi 0, %s115
      %s132 = sphi 0, %s116
    $region4: #{gpt_lm_forward.5} parent=1 // loop_header_branch
      %16 = sbr.rel (%p14) target = $region8
    $region5: #{gpt_lm_forward.5} parent=1 // loop_body
      %s18 = ssub.s32 %s13, 1
      %s19 = ssub.s32 %s13, 2
      %s20 = sadd.s32 %s13, 1
      %s21 = ssub.s32 %s13, %s20
      %p22 = scmp.eq.s32.totalorder %s21, 0
      %s24 = sadd.s32 %s23, 1
      %s25 = scalar_select %p22, %s23, %s24
      %p28 = pneg %p22
      %p29 = scmp.eq.s32.totalorder %s13, 1
      %p30 = por %p28, %p29
      %p31 = scmp.ne.s32.totalorder %s23, %s26
      %p32 = scmp.eq.s32.totalorder %s13, 0
      %p33 = por %p31, %p32
      %p34 = scmp.ne.s32.totalorder %s23, %s26
      %p35 = scmp.eq.s32.totalorder %s18, 1
      %p36 = por %p34, %p35
      %p37 = scmp.ne.s32.totalorder %s26, %s27
      %p38 = scmp.eq.s32.totalorder %s18, 0
      %p39 = por %p37, %p38
      %p40 = scmp.ne.s32.totalorder %s26, %s27
      %p41 = scmp.eq.s32.totalorder %s19, 1
      %p42 = por %p40, %p41
      %p44 = scmp.ne.s32.totalorder %s27, %s43
      %p45 = scmp.eq.s32.totalorder %s19, 0
      %p46 = por %p44, %p45
      %s48 = sadd.s32 %s47, 1
      %p51 = scmp.eq.s32.totalorder %s13, 1
      %p52 = scmp.ne.s32.totalorder %s47, %s49
      %p53 = scmp.eq.s32.totalorder %s13, 0
      %p54 = por %p52, %p53
      %p55 = scmp.ne.s32.totalorder %s47, %s49
      %p56 = scmp.eq.s32.totalorder %s18, 1
      %p57 = por %p55, %p56
      %p58 = scmp.ne.s32.totalorder %s49, %s50
      %p59 = scmp.eq.s32.totalorder %s18, 0
      %p60 = por %p58, %p59
      %p61 = scmp.ne.s32.totalorder %s49, %s50
      %p62 = scmp.eq.s32.totalorder %s19, 1
      %p63 = por %p61, %p62
      %p65 = scmp.ne.s32.totalorder %s50, %s64
      %p66 = scmp.eq.s32.totalorder %s19, 0
      %p67 = por %p65, %p66
      %s69 = sadd.s32 %s68, 1
      %p72 = scmp.eq.s32.totalorder %s13, 1
      %p73 = scmp.ne.s32.totalorder %s68, %s70
      %p74 = scmp.eq.s32.totalorder %s13, 0
      %p75 = por %p73, %p74
      %p76 = scmp.ne.s32.totalorder %s68, %s70
      %p77 = scmp.eq.s32.totalorder %s18, 1
      %p78 = por %p76, %p77
      %p79 = scmp.ne.s32.totalorder %s70, %s71
      %p80 = scmp.eq.s32.totalorder %s18, 0
      %p81 = por %p79, %p80
      %p82 = scmp.ne.s32.totalorder %s70, %s71
      %p83 = scmp.eq.s32.totalorder %s19, 1
      %p84 = por %p82, %p83
      %p86 = scmp.ne.s32.totalorder %s71, %s85
      %p87 = scmp.eq.s32.totalorder %s19, 0
      %p88 = por %p86, %p87
      %s90 = sadd.s32 %s89, 1
      %p93 = scmp.eq.s32.totalorder %s13, 1
      %p94 = scmp.ne.s32.totalorder %s89, %s91
      %p95 = scmp.eq.s32.totalorder %s13, 0
      %p96 = por %p94, %p95
      %p97 = scmp.ne.s32.totalorder %s89, %s91
      %p98 = scmp.eq.s32.totalorder %s18, 1
      %p99 = por %p97, %p98
      %p100 = scmp.ne.s32.totalorder %s91, %s92
      %p101 = scmp.eq.s32.totalorder %s18, 0
      %p102 = por %p100, %p101
      %p103 = scmp.ne.s32.totalorder %s91, %s92
      %p104 = scmp.eq.s32.totalorder %s19, 1
      %p105 = por %p103, %p104
      %p107 = scmp.ne.s32.totalorder %s92, %s106
      %p108 = scmp.eq.s32.totalorder %s19, 0
      %p109 = por %p107, %p108
      %s110 = ssub.s32 %s13, %s20
      %p111 = scmp.eq.s32.totalorder %s110, 0
      %s113 = sadd.s32 %s112, 1
      %s114 = scalar_select %p111, %s112, %s113
      %p117 = pneg %p111
      %p118 = scmp.eq.s32.totalorder %s13, 1
      %p119 = por %p117, %p118
      %p120 = scmp.ne.s32.totalorder %s112, %s115
      %p121 = scmp.eq.s32.totalorder %s13, 0
      %p122 = por %p120, %p121
      %p123 = scmp.ne.s32.totalorder %s112, %s115
      %p124 = scmp.eq.s32.totalorder %s18, 1
      %p125 = por %p123, %p124
      %p126 = scmp.ne.s32.totalorder %s115, %s116
      %p127 = scmp.eq.s32.totalorder %s18, 0
      %p128 = por %p126, %p127
      %p129 = scmp.ne.s32.totalorder %s115, %s116
      %p130 = scmp.eq.s32.totalorder %s19, 1
      %p131 = por %p129, %p130
      %p133 = scmp.ne.s32.totalorder %s116, %s132
      %p134 = scmp.eq.s32.totalorder %s19, 0
      %p135 = por %p133, %p134
      %p136 = scmp.le.s32.totalorder 1, %s13
      %p137 = scmp.lt.s32.totalorder %s13, 3
      %p138 = pnand %p136, %p137
      %p139 = pneg %p138
      // Predicated region
      $region9: #{gpt_lm_forward.5} parent=5 // pred_check
        _
      $region10: #{gpt_lm_forward.5} parent=5 // pred_check_branch
        %141 = sbr.rel (%p138) target = $region12
      $region11: #{gpt_lm_forward.5} parent=5 // pred_region
        %s142 = ssub.s32 %s13, 1
        // Predicated region
        $region13: #{gpt_lm_forward.5} parent=11 // pred_check
          %p143 = pneg %p60
        $region14: #{gpt_lm_forward.5} parent=11 // pred_check_branch
          %145 = sbr.rel (%p143) target = $region16
        $region15: #{gpt_lm_forward.5} parent=11 // pred_region
          _
        $region16: #{gpt_lm_forward.5} parent=11 // pred_fallthru
          _
        // Predicated region
        $region17: #{gpt_lm_forward.5} parent=11 // pred_check
          %p146 = pneg %p81
        $region18: #{gpt_lm_forward.5} parent=11 // pred_check_branch
          %148 = sbr.rel (%p146) target = $region20
        $region19: #{gpt_lm_forward.5} parent=11 // pred_region
          _
        $region20: #{gpt_lm_forward.5} parent=11 // pred_fallthru
          _
        // Predicated region
        $region21: #{gpt_lm_forward.5} parent=11 // pred_check
          %p149 = pneg %p102
        $region22: #{gpt_lm_forward.5} parent=11 // pred_check_branch
          %151 = sbr.rel (%p149) target = $region24
        $region23: #{gpt_lm_forward.5} parent=11 // pred_region
          _
        $region24: #{gpt_lm_forward.5} parent=11 // pred_fallthru
          _
      $region12: #{gpt_lm_forward.5} parent=5 // pred_fallthru
        _
      %p152 = scmp.lt.s32.totalorder %s13, 2
      // Predicated region
      $region25: #{gpt_lm_forward.5} parent=5 // pred_check
        %p153 = pneg %p152
      $region26: #{gpt_lm_forward.5} parent=5 // pred_check_branch
        %155 = sbr.rel (%p153) target = $region28
      $region27: #{gpt_lm_forward.5} parent=5 // pred_region
        // Predicated region
        $region29: #{gpt_lm_forward.5} parent=27 // pred_check
          %p156 = pneg %p33
        $region30: #{gpt_lm_forward.5} parent=27 // pred_check_branch
          %158 = sbr.rel (%p156) target = $region32
        $region31: #{gpt_lm_forward.5} parent=27 // pred_region
          %p159 = scmp.lt.s32.totalorder %s13, 1
          %s160 = scalar_select %p159, %s13, 1
          %s161 = smul.addr %s160, 8
          %s162 = scalar_lea.vmem %s0, %s161
        $region32: #{gpt_lm_forward.5} parent=27 // pred_fallthru
          _
      $region28: #{gpt_lm_forward.5} parent=5 // pred_fallthru
        _
      %p163 = scmp.le.s32.totalorder 1, %s13
      %p164 = scmp.lt.s32.totalorder %s13, 3
      %p165 = pnand %p163, %p164
      %p166 = pneg %p165
      // Predicated region
      $region33: #{gpt_lm_forward.5} parent=5 // pred_check
        _
      $region34: #{gpt_lm_forward.5} parent=5 // pred_check_branch
        %168 = sbr.rel (%p165) target = $region36
      $region35: #{gpt_lm_forward.5} parent=5 // pred_region
        %s169 = ssub.s32 %s13, 1
        %p170 = scmp.lt.s32.totalorder %s18, 1
        %s171 = scalar_select %p170, %s18, 1
        %s172 = smul.addr %s171, 8
        %s173 = scalar_lea.vmem %s0, %s172
        %p174 = pneg %p39
        %p175 = pneg %p36
        %p176 = pneg %p60
        %p177 = pneg %p57
        %p178 = pneg %p81
        %p179 = pneg %p78
        %p180 = pneg %p102
        %p181 = pneg %p99
        %p182 = pneg %p128
        %p183 = pneg %p125
        %s184 = sand.u32 %s115, 1
        %s185 = scalar_lea.sflag [#allocation3], %s184
        %s186 = sand.u32 %s115, 1
        %s187 = smul.addr %s186, 8
        %s188 = scalar_lea.vmem [#allocation2], %s187
        %p189 = scmp.lt.s32.totalorder %s18, 1
        %s190 = scalar_select %p189, %s18, 1
        %s191 = smul.addr %s190, 8
        %s192 = scalar_lea.vmem %s0, %s191
        %v193 = vld [vmem:[%s192] sm:$0xff]
        %v194 = vld [vmem:[%s1] sm:$0x1]
        %v195 = vld [vmem:[%s2] sm:$0x1]
        %vm196 = vcmask 261120
        %v197 = vsel %vm196, %v193, 0.0
        %198 = vadd.xlane.f32.xlu0 %v197
        %v199 = vpop.xlane.xlu0 %198
        %v200 = vrcp.pop 32.0
        %v201 = vmul.f32 %v199, %v200
        %v202 = vsub.f32 %v193, %v201
        %v203 = vmul.f32 %v202, %v202
        %v204 = vsel %vm196, %v203, 0.0
        %205 = vadd.xlane.f32.xlu0 %v204
        %v206 = vpop.xlane.xlu0 %205
        %v207 = vmul.f32 %v206, %v200
        %v208 = vadd.f32 %v207, 1e-05
        %v209 = vrsqrt.pop %v208
        %v210 = vmul.f32 %v202, %v209
        %v212 = vlaneseq
        %v213 = vshrl.u32 %v212, 7
        %v214 = vsub.s32 0, %v213
        %v215 = vrot.slane %v194, %v214
        %v217 = vmul.f32 %v210, %v215
        %v219 = vlaneseq
        %v220 = vshrl.u32 %v219, 7
        %v221 = vsub.s32 0, %v220
        %v222 = vrot.slane %v195, %v221
        %v224 = vadd.f32 %v217, %v222
        %v225 = vld [vmem:[%s3] sm:$0xff]
        %v226 = vld [vmem:[%s3 + $0x8] sm:$0xff]
        %v227 = vld [vmem:[%s3 + $0x10] sm:$0xff]
        %v228 = vld [vmem:[%s3 + $0x18] sm:$0xff]
        %v229 = vld [vmem:[%s3 + $0x20] sm:$0xff]
        %v230 = vld [vmem:[%s3 + $0x28] sm:$0xff]
        %v231 = vld [vmem:[%s3 + $0x30] sm:$0xff]
        %v232 = vld [vmem:[%s3 + $0x38] sm:$0xff]
        %v233 = vld [vmem:[%s3 + $0x40] sm:$0xff]
        %v234 = vld [vmem:[%s3 + $0x48] sm:$0xff]
        %v235 = vld [vmem:[%s3 + $0x50] sm:$0xff]
        %v236 = vld [vmem:[%s3 + $0x58] sm:$0xff]
        %v237 = vld [vmem:[%s3 + $0x60] sm:$0xff]
        %v238 = vld [vmem:[%s3 + $0x68] sm:$0xff]
        %v239 = vld [vmem:[%s3 + $0x70] sm:$0xff]
        %v240 = vld [vmem:[%s3 + $0x78] sm:$0xff]
        %v242 = vsel %vm196, %v224, 0
        %v245 = vsel %vm196, %v225, 0
        %v248 = vsel %vm196, %v226, 0
        %v251 = vsel %vm196, %v227, 0
        %v254 = vsel %vm196, %v228, 0
        %v257 = vsel %vm196, %v229, 0
        %v260 = vsel %vm196, %v230, 0
        %v263 = vsel %vm196, %v231, 0
        %v266 = vsel %vm196, %v232, 0
        %v269 = vsel %vm196, %v233, 0
        %v272 = vsel %vm196, %v234, 0
        %v275 = vsel %vm196, %v235, 0
        %v278 = vsel %vm196, %v236, 0
        %v281 = vsel %vm196, %v237, 0
        %v284 = vsel %vm196, %v238, 0
        %v287 = vsel %vm196, %v239, 0
        %v290 = vsel %vm196, %v240, 0
        %292 = vmatprep.subr.mxu0 0.0
        %293 = vmatpush1.xpose.msra.mxu0 %v245
        %294 = vmatprep.subr.mxu0 0.0
        %295 = vmatpush1.xpose.msra.mxu0 %v248
        %296 = vmatprep.subr.mxu0 0.0
        %297 = vmatpush1.xpose.msra.mxu0 %v251
        %298 = vmatprep.subr.mxu0 0.0
        %299 = vmatpush1.xpose.msra.mxu0 %v254
        %300 = vmatprep.subr.mxu0 0.0
        %301 = vmatpush1.xpose.msra.mxu0 %v257
        %302 = vmatprep.subr.mxu0 0.0
        %303 = vmatpush1.xpose.msra.mxu0 %v260
        %304 = vmatprep.subr.mxu0 0.0
        %305 = vmatpush1.xpose.msra.mxu0 %v263
        %306 = vmatprep.subr.mxu0 0.0
        %307 = vmatpush1.xpose.msra.mxu0 %v266
        %308 = vmatprep.subr.mxu0 0.0
        %309 = vmatpush1.xpose.msra.mxu0 %v269
        %310 = vmatprep.subr.mxu0 0.0
        %311 = vmatpush1.xpose.msra.mxu0 %v272
        %312 = vmatprep.subr.mxu0 0.0
        %313 = vmatpush1.xpose.msra.mxu0 %v275
        %314 = vmatprep.subr.mxu0 0.0
        %315 = vmatpush1.xpose.msra.mxu0 %v278
        %316 = vmatprep.subr.mxu0 0.0
        %317 = vmatpush1.xpose.msra.mxu0 %v281
        %318 = vmatprep.subr.mxu0 0.0
        %319 = vmatpush1.xpose.msra.mxu0 %v284
        %320 = vmatprep.subr.mxu0 0.0
        %321 = vmatpush1.xpose.msra.mxu0 %v287
        %322 = vmatprep.subr.mxu0 0.0
        %323 = vmatpush1.xpose.msra.mxu0 %v290
        %324 = vmatprep.subr.mxu0 0.0
        %325 = vmatpush1.xpose.msra.mxu0 0.0
        %326 = vmatprep.subr.mxu0 0.0
        %327 = vmatpush1.xpose.msra.mxu0 0.0
        %328 = vmatprep.subr.mxu0 0.0
        %329 = vmatpush1.xpose.msra.mxu0 0.0
        %330 = vmatprep.subr.mxu0 0.0
        %331 = vmatpush1.xpose.msra.mxu0 0.0
        %332 = vmatprep.subr.mxu0 0.0
        %333 = vmatpush1.xpose.msra.mxu0 0.0
        %334 = vmatprep.subr.mxu0 0.0
        %335 = vmatpush1.xpose.msra.mxu0 0.0
        %336 = vmatprep.subr.mxu0 0.0
        %337 = vmatpush1.xpose.msra.mxu0 0.0
        %338 = vmatprep.subr.mxu0 0.0
        %339 = vmatpush1.xpose.msra.mxu0 0.0
        %340 = vmatprep.subr.mxu0 0.0
        %341 = vmatpush1.xpose.msra.mxu0 0.0
        %342 = vmatprep.subr.mxu0 0.0
        %343 = vmatpush1.xpose.msra.mxu0 0.0
        %344 = vmatprep.subr.mxu0 0.0
        %345 = vmatpush1.xpose.msra.mxu0 0.0
        %346 = vmatprep.subr.mxu0 0.0
        %347 = vmatpush1.xpose.msra.mxu0 0.0
        %348 = vmatprep.subr.mxu0 0.0
        %349 = vmatpush1.xpose.msra.mxu0 0.0
        %350 = vmatprep.subr.mxu0 0.0
        %351 = vmatpush1.xpose.msra.mxu0 0.0
        %352 = vmatprep.subr.mxu0 0.0
        %353 = vmatpush1.xpose.msra.mxu0 0.0
        %354 = vmatprep.subr.mxu0 0.0
        %355 = vmatpush1.xpose.msra.mxu0 0.0
        %356 = vmatprep.mubr.f32.mxu0 0.0
        %357 = vmatmul.mubr.f32.gmra.mrb[0].mxu0 %v242
        %v358 = vpop.f32.mrb[0].mxu0
        %v359 = vadd.f32 0.0, %v358
        %v360 = vpop.f32.mrb[0].mxu0
        %361 = vdwg.mxu0
        %362 = vst [vmem:[%s188] sm:$0xff] %v359
        %s363 = sand.u32 %s115, 1
        %s364 = scalar_lea.sflag [#allocation3], %s363
        %s365 = sand.u32 %s115, 1
        %s366 = smul.addr %s365, 8
        %s367 = scalar_lea.vmem [#allocation2], %s366
        // Predicated region
        $region37: #{gpt_lm_forward.5} parent=35 // pred_check
          %p368 = pneg %p125
        $region38: #{gpt_lm_forward.5} parent=35 // pred_check_branch
          %370 = sbr.rel (%p368) target = $region40
        $region39: #{gpt_lm_forward.5} parent=35 // pred_region
          %s372 = ssub.s32 128, 128
          %373 = vsyncadd %s364, %s372
          %s374 = smul.addr %s18, 128
          %s375 = scalar_lea.hbm %s4, %s374
          %s377 = sshll.u32 %s367, 4
          %s378 = int_to_ptr.vmem [resolvable:$true] %s377
          %380 = dma.vmem_to_hbm [thread:$0]  %s378, 128, %s375, %s364
        $region40: #{gpt_lm_forward.5} parent=35 // pred_fallthru
          _
      $region36: #{gpt_lm_forward.5} parent=5 // pred_fallthru
        _
      %p381 = scmp.le.s32.totalorder 2, %s13
      // Predicated region
      $region41: #{gpt_lm_forward.5} parent=5 // pred_check
        %p382 = pneg %p381
      $region42: #{gpt_lm_forward.5} parent=5 // pred_check_branch
        %384 = sbr.rel (%p382) target = $region44
      $region43: #{gpt_lm_forward.5} parent=5 // pred_region
        %s385 = ssub.s32 %s13, 2
        // Predicated region
        $region45: #{gpt_lm_forward.5} parent=43 // pred_check
          %p386 = pneg %p131
        $region46: #{gpt_lm_forward.5} parent=43 // pred_check_branch
          %388 = sbr.rel (%p386) target = $region48
        $region47: #{gpt_lm_forward.5} parent=43 // pred_region
          %s389 = sand.u32 %s116, 1
          %s390 = scalar_lea.sflag [#allocation3], %s389
          %s391 = sand.u32 %s116, 1
          %s392 = smul.addr %s391, 8
          %s393 = scalar_lea.vmem [#allocation2], %s392
          %394 = dma.done %s390, 128
        $region48: #{gpt_lm_forward.5} parent=43 // pred_fallthru
          _
      $region44: #{gpt_lm_forward.5} parent=5 // pred_fallthru
        _
    $region6: #{gpt_lm_forward.5} parent=1 // loop_footer
      %s17 = sadd.s32 1, %s13
    $region7: #{gpt_lm_forward.5} parent=1 // loop_footer_branch
      %12 = sbr.rel target = $region3
    $region8: #{gpt_lm_forward.5} parent=1 // loop_exit
      _
    %395 = vsyncpa [#allocation3], 1
    %s396 = scalar_lea.sflag [#allocation3], 1
    %397 = vsyncpa %s396, 1

// kernel: gpt_lm_forward.3
$region0: #{gpt_lm_forward.3}
  #allocation0 [shape = 'u32[]', space=smem, size = 0x4, offset = 0x4, fixed_abs, tag = 'smem constant byte address 0x4 - core index']
  #allocation1 [shape = 'u32[144,128]{1,0:T(1,128)}', space=vmem, size = 0x12000, scoped, tag = 'internal scratch']
  %s0 = inlined_call_operand.vmem [shape: f32[16,32], index: 0, kind: input, shape index: {}]
  %s1 = inlined_call_operand.vmem [shape: f32[2,1,8], index: 1, kind: input, shape index: {}]
  %s2 = inlined_call_operand.vmem [shape: f32[1,32], index: 2, kind: input, shape index: {}]
  %s3 = inlined_call_operand.vmem [shape: f32[1,32], index: 3, kind: input, shape index: {}]
  %s4 = inlined_call_operand.vmem [shape: f32[32,96], index: 4, kind: input, shape index: {}]
  %s5 = inlined_call_operand.vmem [shape: f32[1,96], index: 5, kind: input, shape index: {}]
  %s6 = inlined_call_operand.vmem [shape: f32[32,32], index: 6, kind: input, shape index: {}]
  %s7 = inlined_call_operand.vmem [shape: f32[1,32], index: 7, kind: input, shape index: {}]
  %s8 = inlined_call_operand.vmem [shape: f32[1,32], index: 8, kind: input, shape index: {}]
  %s9 = inlined_call_operand.vmem [shape: f32[1,32], index: 9, kind: input, shape index: {}]
  %s10 = inlined_call_operand.vmem [shape: f32[32,128], index: 10, kind: input, shape index: {}]
  %s11 = inlined_call_operand.vmem [shape: f32[1,128], index: 11, kind: input, shape index: {}]
  %s12 = inlined_call_operand.vmem [shape: f32[128,32], index: 12, kind: input, shape index: {}]
  %s13 = inlined_call_operand.vmem [shape: f32[1,32], index: 13, kind: input, shape index: {}]
  %s14 = inlined_call_operand.vmem [shape: f32[16,32], index: 14, kind: output, shape index: {}]
  %s15 = sld [smem:[#allocation0]]
  $region89: #{gpt_lm_forward.3} parent=0
    _
  %s17 = ssub.s32 1, %s15
  %s18 = scalar_select 0, %s17, %s15
  loop: start=0, step=1, limit=4
  $region2: #{gpt_lm_forward.3} parent=0 // loop_pre_header
    _
  $region3: #{gpt_lm_forward.3} parent=0 // loop_header
    %s20 = sphi 0, %s24
    %p21 = scmp.ge.s32.totalorder %s20, 4
    %s30 = sphi 0, %s32
    %s33 = sphi 0, %s30
    %s34 = sphi 0, %s33
    %s50 = sphi 0, %s34
    %s56 = sphi 0, %s58
    %s59 = sphi 0, %s56
    %s60 = sphi 0, %s59
    %s76 = sphi 0, %s60
    %s80 = sphi 0, %s80
    %s82 = sphi 0, %s80
    %s83 = sphi 0, %s82
    %s97 = sphi 0, %s83
    %s101 = sphi 0, %s101
    %s103 = sphi 0, %s101
    %s104 = sphi 0, %s103
    %s118 = sphi 0, %s104
    %s122 = sphi 0, %s122
    %s124 = sphi 0, %s122
    %s125 = sphi 0, %s124
    %s139 = sphi 0, %s125
    %s143 = sphi 0, %s143
    %s145 = sphi 0, %s143
    %s146 = sphi 0, %s145
    %s160 = sphi 0, %s146
    %s164 = sphi 0, %s164
    %s166 = sphi 0, %s164
    %s167 = sphi 0, %s166
    %s181 = sphi 0, %s167
    %s185 = sphi 0, %s185
    %s187 = sphi 0, %s185
    %s188 = sphi 0, %s187
    %s202 = sphi 0, %s188
    %s206 = sphi 0, %s206
    %s208 = sphi 0, %s206
    %s209 = sphi 0, %s208
    %s223 = sphi 0, %s209
    %s227 = sphi 0, %s227
    %s229 = sphi 0, %s227
    %s230 = sphi 0, %s229
    %s244 = sphi 0, %s230
    %s248 = sphi 0, %s248
    %s250 = sphi 0, %s248
    %s251 = sphi 0, %s250
    %s265 = sphi 0, %s251
    %s269 = sphi 0, %s269
    %s271 = sphi 0, %s269
    %s272 = sphi 0, %s271
    %s286 = sphi 0, %s272
    %s290 = sphi 0, %s290
    %s292 = sphi 0, %s290
    %s293 = sphi 0, %s292
    %s307 = sphi 0, %s293
    %s311 = sphi 0, %s311
    %s313 = sphi 0, %s311
    %s314 = sphi 0, %s313
    %s328 = sphi 0, %s314
    %s334 = sphi 0, %s336
    %s337 = sphi 0, %s334
    %s338 = sphi 0, %s337
    %s354 = sphi 0, %s338
  $region4: #{gpt_lm_forward.3} parent=0 // loop_header_branch
    %23 = sbr.rel (%p21) target = $region8
  $region5: #{gpt_lm_forward.3} parent=0 // loop_body
    %s25 = ssub.s32 %s20, 1
    %s26 = ssub.s32 %s20, 2
    %s27 = sadd.s32 %s20, 1
    %s28 = ssub.s32 %s20, %s27
    %p29 = scmp.eq.s32.totalorder %s28, 0
    %s31 = sadd.s32 %s30, 1
    %s32 = scalar_select %p29, %s30, %s31
    %p35 = pneg %p29
    %p36 = scmp.eq.s32.totalorder %s20, 1
    %p37 = por %p35, %p36
    %p38 = scmp.ne.s32.totalorder %s30, %s33
    %p39 = scmp.eq.s32.totalorder %s20, 0
    %p40 = por %p38, %p39
    %p41 = scmp.ne.s32.totalorder %s30, %s33
    %p42 = scmp.eq.s32.totalorder %s25, 1
    %p43 = por %p41, %p42
    %p44 = scmp.ne.s32.totalorder %s33, %s34
    %p45 = scmp.eq.s32.totalorder %s25, 0
    %p46 = por %p44, %p45
    %p47 = scmp.ne.s32.totalorder %s33, %s34
    %p48 = scmp.eq.s32.totalorder %s26, 1
    %p49 = por %p47, %p48
    %p51 = scmp.ne.s32.totalorder %s34, %s50
    %p52 = scmp.eq.s32.totalorder %s26, 0
    %p53 = por %p51, %p52
    %s54 = ssub.s32 %s20, %s27
    %p55 = scmp.eq.s32.totalorder %s54, 0
    %s57 = sadd.s32 %s56, 1
    %s58 = scalar_select %p55, %s56, %s57
    %p61 = pneg %p55
    %p62 = scmp.eq.s32.totalorder %s20, 1
    %p63 = por %p61, %p62
    %p64 = scmp.ne.s32.totalorder %s56, %s59
    %p65 = scmp.eq.s32.totalorder %s20, 0
    %p66 = por %p64, %p65
    %p67 = scmp.ne.s32.totalorder %s56, %s59
    %p68 = scmp.eq.s32.totalorder %s25, 1
    %p69 = por %p67, %p68
    %p70 = scmp.ne.s32.totalorder %s59, %s60
    %p71 = scmp.eq.s32.totalorder %s25, 0
    %p72 = por %p70, %p71
    %p73 = scmp.ne.s32.totalorder %s59, %s60
    %p74 = scmp.eq.s32.totalorder %s26, 1
    %p75 = por %p73, %p74
    %p77 = scmp.ne.s32.totalorder %s60, %s76
    %p78 = scmp.eq.s32.totalorder %s26, 0
    %p79 = por %p77, %p78
    %s81 = sadd.s32 %s80, 1
    %p84 = scmp.eq.s32.totalorder %s20, 1
    %p85 = scmp.ne.s32.totalorder %s80, %s82
    %p86 = scmp.eq.s32.totalorder %s20, 0
    %p87 = por %p85, %p86
    %p88 = scmp.ne.s32.totalorder %s80, %s82
    %p89 = scmp.eq.s32.totalorder %s25, 1
    %p90 = por %p88, %p89
    %p91 = scmp.ne.s32.totalorder %s82, %s83
    %p92 = scmp.eq.s32.totalorder %s25, 0
    %p93 = por %p91, %p92
    %p94 = scmp.ne.s32.totalorder %s82, %s83
    %p95 = scmp.eq.s32.totalorder %s26, 1
    %p96 = por %p94, %p95
    %p98 = scmp.ne.s32.totalorder %s83, %s97
    %p99 = scmp.eq.s32.totalorder %s26, 0
    %p100 = por %p98, %p99
    %s102 = sadd.s32 %s101, 1
    %p105 = scmp.eq.s32.totalorder %s20, 1
    %p106 = scmp.ne.s32.totalorder %s101, %s103
    %p107 = scmp.eq.s32.totalorder %s20, 0
    %p108 = por %p106, %p107
    %p109 = scmp.ne.s32.totalorder %s101, %s103
    %p110 = scmp.eq.s32.totalorder %s25, 1
    %p111 = por %p109, %p110
    %p112 = scmp.ne.s32.totalorder %s103, %s104
    %p113 = scmp.eq.s32.totalorder %s25, 0
    %p114 = por %p112, %p113
    %p115 = scmp.ne.s32.totalorder %s103, %s104
    %p116 = scmp.eq.s32.totalorder %s26, 1
    %p117 = por %p115, %p116
    %p119 = scmp.ne.s32.totalorder %s104, %s118
    %p120 = scmp.eq.s32.totalorder %s26, 0
    %p121 = por %p119, %p120
    %s123 = sadd.s32 %s122, 1
    %p126 = scmp.eq.s32.totalorder %s20, 1
    %p127 = scmp.ne.s32.totalorder %s122, %s124
    %p128 = scmp.eq.s32.totalorder %s20, 0
    %p129 = por %p127, %p128
    %p130 = scmp.ne.s32.totalorder %s122, %s124
    %p131 = scmp.eq.s32.totalorder %s25, 1
    %p132 = por %p130, %p131
    %p133 = scmp.ne.s32.totalorder %s124, %s125
    %p134 = scmp.eq.s32.totalorder %s25, 0
    %p135 = por %p133, %p134
    %p136 = scmp.ne.s32.totalorder %s124, %s125
    %p137 = scmp.eq.s32.totalorder %s26, 1
    %p138 = por %p136, %p137
    %p140 = scmp.ne.s32.totalorder %s125, %s139
    %p141 = scmp.eq.s32.totalorder %s26, 0
    %p142 = por %p140, %p141
    %s144 = sadd.s32 %s143, 1
    %p147 = scmp.eq.s32.totalorder %s20, 1
    %p148 = scmp.ne.s32.totalorder %s143, %s145
    %p149 = scmp.eq.s32.totalorder %s20, 0
    %p150 = por %p148, %p149
    %p151 = scmp.ne.s32.totalorder %s143, %s145
    %p152 = scmp.eq.s32.totalorder %s25, 1
    %p153 = por %p151, %p152
    %p154 = scmp.ne.s32.totalorder %s145, %s146
    %p155 = scmp.eq.s32.totalorder %s25, 0
    %p156 = por %p154, %p155
    %p157 = scmp.ne.s32.totalorder %s145, %s146
    %p158 = scmp.eq.s32.totalorder %s26, 1
    %p159 = por %p157, %p158
    %p161 = scmp.ne.s32.totalorder %s146, %s160
    %p162 = scmp.eq.s32.totalorder %s26, 0
    %p163 = por %p161, %p162
    %s165 = sadd.s32 %s164, 1
    %p168 = scmp.eq.s32.totalorder %s20, 1
    %p169 = scmp.ne.s32.totalorder %s164, %s166
    %p170 = scmp.eq.s32.totalorder %s20, 0
    %p171 = por %p169, %p170
    %p172 = scmp.ne.s32.totalorder %s164, %s166
    %p173 = scmp.eq.s32.totalorder %s25, 1
    %p174 = por %p172, %p173
    %p175 = scmp.ne.s32.totalorder %s166, %s167
    %p176 = scmp.eq.s32.totalorder %s25, 0
    %p177 = por %p175, %p176
    %p178 = scmp.ne.s32.totalorder %s166, %s167
    %p179 = scmp.eq.s32.totalorder %s26, 1
    %p180 = por %p178, %p179
    %p182 = scmp.ne.s32.totalorder %s167, %s181
    %p183 = scmp.eq.s32.totalorder %s26, 0
    %p184 = por %p182, %p183
    %s186 = sadd.s32 %s185, 1
    %p189 = scmp.eq.s32.totalorder %s20, 1
    %p190 = scmp.ne.s32.totalorder %s185, %s187
    %p191 = scmp.eq.s32.totalorder %s20, 0
    %p192 = por %p190, %p191
    %p193 = scmp.ne.s32.totalorder %s185, %s187
    %p194 = scmp.eq.s32.totalorder %s25, 1
    %p195 = por %p193, %p194
    %p196 = scmp.ne.s32.totalorder %s187, %s188
    %p197 = scmp.eq.s32.totalorder %s25, 0
    %p198 = por %p196, %p197
    %p199 = scmp.ne.s32.totalorder %s187, %s188
    %p200 = scmp.eq.s32.totalorder %s26, 1
    %p201 = por %p199, %p200
    %p203 = scmp.ne.s32.totalorder %s188, %s202
    %p204 = scmp.eq.s32.totalorder %s26, 0
    %p205 = por %p203, %p204
    %s207 = sadd.s32 %s206, 1
    %p210 = scmp.eq.s32.totalorder %s20, 1
    %p211 = scmp.ne.s32.totalorder %s206, %s208
    %p212 = scmp.eq.s32.totalorder %s20, 0
    %p213 = por %p211, %p212
    %p214 = scmp.ne.s32.totalorder %s206, %s208
    %p215 = scmp.eq.s32.totalorder %s25, 1
    %p216 = por %p214, %p215
    %p217 = scmp.ne.s32.totalorder %s208, %s209
    %p218 = scmp.eq.s32.totalorder %s25, 0
    %p219 = por %p217, %p218
    %p220 = scmp.ne.s32.totalorder %s208, %s209
    %p221 = scmp.eq.s32.totalorder %s26, 1
    %p222 = por %p220, %p221
    %p224 = scmp.ne.s32.totalorder %s209, %s223
    %p225 = scmp.eq.s32.totalorder %s26, 0
    %p226 = por %p224, %p225
    %s228 = sadd.s32 %s227, 1
    %p231 = scmp.eq.s32.totalorder %s20, 1
    %p232 = scmp.ne.s32.totalorder %s227, %s229
    %p233 = scmp.eq.s32.totalorder %s20, 0
    %p234 = por %p232, %p233
    %p235 = scmp.ne.s32.totalorder %s227, %s229
    %p236 = scmp.eq.s32.totalorder %s25, 1
    %p237 = por %p235, %p236
    %p238 = scmp.ne.s32.totalorder %s229, %s230
    %p239 = scmp.eq.s32.totalorder %s25, 0
    %p240 = por %p238, %p239
    %p241 = scmp.ne.s32.totalorder %s229, %s230
    %p242 = scmp.eq.s32.totalorder %s26, 1
    %p243 = por %p241, %p242
    %p245 = scmp.ne.s32.totalorder %s230, %s244
    %p246 = scmp.eq.s32.totalorder %s26, 0
    %p247 = por %p245, %p246
    %s249 = sadd.s32 %s248, 1
    %p252 = scmp.eq.s32.totalorder %s20, 1
    %p253 = scmp.ne.s32.totalorder %s248, %s250
    %p254 = scmp.eq.s32.totalorder %s20, 0
    %p255 = por %p253, %p254
    %p256 = scmp.ne.s32.totalorder %s248, %s250
    %p257 = scmp.eq.s32.totalorder %s25, 1
    %p258 = por %p256, %p257
    %p259 = scmp.ne.s32.totalorder %s250, %s251
    %p260 = scmp.eq.s32.totalorder %s25, 0
    %p261 = por %p259, %p260
    %p262 = scmp.ne.s32.totalorder %s250, %s251
    %p263 = scmp.eq.s32.totalorder %s26, 1
    %p264 = por %p262, %p263
    %p266 = scmp.ne.s32.totalorder %s251, %s265
    %p267 = scmp.eq.s32.totalorder %s26, 0
    %p268 = por %p266, %p267
    %s270 = sadd.s32 %s269, 1
    %p273 = scmp.eq.s32.totalorder %s20, 1
    %p274 = scmp.ne.s32.totalorder %s269, %s271
    %p275 = scmp.eq.s32.totalorder %s20, 0
    %p276 = por %p274, %p275
    %p277 = scmp.ne.s32.totalorder %s269, %s271
    %p278 = scmp.eq.s32.totalorder %s25, 1
    %p279 = por %p277, %p278
    %p280 = scmp.ne.s32.totalorder %s271, %s272
    %p281 = scmp.eq.s32.totalorder %s25, 0
    %p282 = por %p280, %p281
    %p283 = scmp.ne.s32.totalorder %s271, %s272
    %p284 = scmp.eq.s32.totalorder %s26, 1
    %p285 = por %p283, %p284
    %p287 = scmp.ne.s32.totalorder %s272, %s286
    %p288 = scmp.eq.s32.totalorder %s26, 0
    %p289 = por %p287, %p288
    %s291 = sadd.s32 %s290, 1
    %p294 = scmp.eq.s32.totalorder %s20, 1
    %p295 = scmp.ne.s32.totalorder %s290, %s292
    %p296 = scmp.eq.s32.totalorder %s20, 0
    %p297 = por %p295, %p296
    %p298 = scmp.ne.s32.totalorder %s290, %s292
    %p299 = scmp.eq.s32.totalorder %s25, 1
    %p300 = por %p298, %p299
    %p301 = scmp.ne.s32.totalorder %s292, %s293
    %p302 = scmp.eq.s32.totalorder %s25, 0
    %p303 = por %p301, %p302
    %p304 = scmp.ne.s32.totalorder %s292, %s293
    %p305 = scmp.eq.s32.totalorder %s26, 1
    %p306 = por %p304, %p305
    %p308 = scmp.ne.s32.totalorder %s293, %s307
    %p309 = scmp.eq.s32.totalorder %s26, 0
    %p310 = por %p308, %p309
    %s312 = sadd.s32 %s311, 1
    %p315 = scmp.eq.s32.totalorder %s20, 1
    %p316 = scmp.ne.s32.totalorder %s311, %s313
    %p317 = scmp.eq.s32.totalorder %s20, 0
    %p318 = por %p316, %p317
    %p319 = scmp.ne.s32.totalorder %s311, %s313
    %p320 = scmp.eq.s32.totalorder %s25, 1
    %p321 = por %p319, %p320
    %p322 = scmp.ne.s32.totalorder %s313, %s314
    %p323 = scmp.eq.s32.totalorder %s25, 0
    %p324 = por %p322, %p323
    %p325 = scmp.ne.s32.totalorder %s313, %s314
    %p326 = scmp.eq.s32.totalorder %s26, 1
    %p327 = por %p325, %p326
    %p329 = scmp.ne.s32.totalorder %s314, %s328
    %p330 = scmp.eq.s32.totalorder %s26, 0
    %p331 = por %p329, %p330
    %s332 = ssub.s32 %s20, %s27
    %p333 = scmp.eq.s32.totalorder %s332, 0
    %s335 = sadd.s32 %s334, 1
    %s336 = scalar_select %p333, %s334, %s335
    %p339 = pneg %p333
    %p340 = scmp.eq.s32.totalorder %s20, 1
    %p341 = por %p339, %p340
    %p342 = scmp.ne.s32.totalorder %s334, %s337
    %p343 = scmp.eq.s32.totalorder %s20, 0
    %p344 = por %p342, %p343
    %p345 = scmp.ne.s32.totalorder %s334, %s337
    %p346 = scmp.eq.s32.totalorder %s25, 1
    %p347 = por %p345, %p346
    %p348 = scmp.ne.s32.totalorder %s337, %s338
    %p349 = scmp.eq.s32.totalorder %s25, 0
    %p350 = por %p348, %p349
    %p351 = scmp.ne.s32.totalorder %s337, %s338
    %p352 = scmp.eq.s32.totalorder %s26, 1
    %p353 = por %p351, %p352
    %p355 = scmp.ne.s32.totalorder %s338, %s354
    %p356 = scmp.eq.s32.totalorder %s26, 0
    %p357 = por %p355, %p356
    %p358 = scmp.le.s32.totalorder 1, %s20
    %p359 = scmp.lt.s32.totalorder %s20, 3
    %p360 = pnand %p358, %p359
    %p361 = pneg %p360
    // Predicated region
    $region9: #{gpt_lm_forward.3} parent=5 // pred_check
      _
    $region10: #{gpt_lm_forward.3} parent=5 // pred_check_branch
      %363 = sbr.rel (%p360) target = $region12
    $region11: #{gpt_lm_forward.3} parent=5 // pred_region
      %s364 = ssub.s32 %s20, 1
      // Predicated region
      $region13: #{gpt_lm_forward.3} parent=11 // pred_check
        %p365 = pneg %p93
      $region14: #{gpt_lm_forward.3} parent=11 // pred_check_branch
        %367 = sbr.rel (%p365) target = $region16
      $region15: #{gpt_lm_forward.3} parent=11 // pred_region
        _
      $region16: #{gpt_lm_forward.3} parent=11 // pred_fallthru
        _
      // Predicated region
      $region17: #{gpt_lm_forward.3} parent=11 // pred_check
        %p368 = pneg %p114
      $region18: #{gpt_lm_forward.3} parent=11 // pred_check_branch
        %370 = sbr.rel (%p368) target = $region20
      $region19: #{gpt_lm_forward.3} parent=11 // pred_region
        _
      $region20: #{gpt_lm_forward.3} parent=11 // pred_fallthru
        _
      // Predicated region
      $region21: #{gpt_lm_forward.3} parent=11 // pred_check
        %p371 = pneg %p135
      $region22: #{gpt_lm_forward.3} parent=11 // pred_check_branch
        %373 = sbr.rel (%p371) target = $region24
      $region23: #{gpt_lm_forward.3} parent=11 // pred_region
        _
      $region24: #{gpt_lm_forward.3} parent=11 // pred_fallthru
        _
      // Predicated region
      $region25: #{gpt_lm_forward.3} parent=11 // pred_check
        %p374 = pneg %p156
      $region26: #{gpt_lm_forward.3} parent=11 // pred_check_branch
        %376 = sbr.rel (%p374) target = $region28
      $region27: #{gpt_lm_forward.3} parent=11 // pred_region
        _
      $region28: #{gpt_lm_forward.3} parent=11 // pred_fallthru
        _
      // Predicated region
      $region29: #{gpt_lm_forward.3} parent=11 // pred_check
        %p377 = pneg %p177
      $region30: #{gpt_lm_forward.3} parent=11 // pred_check_branch
        %379 = sbr.rel (%p377) target = $region32
      $region31: #{gpt_lm_forward.3} parent=11 // pred_region
        _
      $region32: #{gpt_lm_forward.3} parent=11 // pred_fallthru
        _
      // Predicated region
      $region33: #{gpt_lm_forward.3} parent=11 // pred_check
        %p380 = pneg %p198
      $region34: #{gpt_lm_forward.3} parent=11 // pred_check_branch
        %382 = sbr.rel (%p380) target = $region36
      $region35: #{gpt_lm_forward.3} parent=11 // pred_region
        _
      $region36: #{gpt_lm_forward.3} parent=11 // pred_fallthru
        _
      // Predicated region
      $region37: #{gpt_lm_forward.3} parent=11 // pred_check
        %p383 = pneg %p219
      $region38: #{gpt_lm_forward.3} parent=11 // pred_check_branch
        %385 = sbr.rel (%p383) target = $region40
      $region39: #{gpt_lm_forward.3} parent=11 // pred_region
        _
      $region40: #{gpt_lm_forward.3} parent=11 // pred_fallthru
        _
      // Predicated region
      $region41: #{gpt_lm_forward.3} parent=11 // pred_check
        %p386 = pneg %p240
      $region42: #{gpt_lm_forward.3} parent=11 // pred_check_branch
        %388 = sbr.rel (%p386) target = $region44
      $region43: #{gpt_lm_forward.3} parent=11 // pred_region
        _
      $region44: #{gpt_lm_forward.3} parent=11 // pred_fallthru
        _
      // Predicated region
      $region45: #{gpt_lm_forward.3} parent=11 // pred_check
        %p389 = pneg %p261
      $region46: #{gpt_lm_forward.3} parent=11 // pred_check_branch
        %391 = sbr.rel (%p389) target = $region48
      $region47: #{gpt_lm_forward.3} parent=11 // pred_region
        _
      $region48: #{gpt_lm_forward.3} parent=11 // pred_fallthru
        _
      // Predicated region
      $region49: #{gpt_lm_forward.3} parent=11 // pred_check
        %p392 = pneg %p282
      $region50: #{gpt_lm_forward.3} parent=11 // pred_check_branch
        %394 = sbr.rel (%p392) target = $region52
      $region51: #{gpt_lm_forward.3} parent=11 // pred_region
        _
      $region52: #{gpt_lm_forward.3} parent=11 // pred_fallthru
        _
      // Predicated region
      $region53: #{gpt_lm_forward.3} parent=11 // pred_check
        %p395 = pneg %p303
      $region54: #{gpt_lm_forward.3} parent=11 // pred_check_branch
        %397 = sbr.rel (%p395) target = $region56
      $region55: #{gpt_lm_forward.3} parent=11 // pred_region
        _
      $region56: #{gpt_lm_forward.3} parent=11 // pred_fallthru
        _
      // Predicated region
      $region57: #{gpt_lm_forward.3} parent=11 // pred_check
        %p398 = pneg %p324
      $region58: #{gpt_lm_forward.3} parent=11 // pred_check_branch
        %400 = sbr.rel (%p398) target = $region60
      $region59: #{gpt_lm_forward.3} parent=11 // pred_region
        _
      $region60: #{gpt_lm_forward.3} parent=11 // pred_fallthru
        _
    $region12: #{gpt_lm_forward.3} parent=5 // pred_fallthru
      _
    %p401 = scmp.lt.s32.totalorder %s20, 2
    // Predicated region
    $region61: #{gpt_lm_forward.3} parent=5 // pred_check
      %p402 = pneg %p401
    $region62: #{gpt_lm_forward.3} parent=5 // pred_check_branch
      %404 = sbr.rel (%p402) target = $region64
    $region63: #{gpt_lm_forward.3} parent=5 // pred_region
      // Predicated region
      $region65: #{gpt_lm_forward.3} parent=63 // pred_check
        %p405 = pneg %p40
      $region66: #{gpt_lm_forward.3} parent=63 // pred_check_branch
        %407 = sbr.rel (%p405) target = $region68
      $region67: #{gpt_lm_forward.3} parent=63 // pred_region
        %p408 = scmp.lt.s32.totalorder %s20, 1
        %s409 = scalar_select %p408, %s20, 1
        %s410 = smul.addr %s409, 8
        %s411 = scalar_lea.vmem %s0, %s410
      $region68: #{gpt_lm_forward.3} parent=63 // pred_fallthru
        _
      // Predicated region
      $region69: #{gpt_lm_forward.3} parent=63 // pred_check
        %p412 = pneg %p66
      $region70: #{gpt_lm_forward.3} parent=63 // pred_check_branch
        %414 = sbr.rel (%p412) target = $region72
      $region71: #{gpt_lm_forward.3} parent=63 // pred_region
        %p415 = scmp.lt.s32.totalorder %s20, 1
        %s416 = scalar_select %p415, %s20, 1
        %s417 = scalar_lea.vmem %s1, %s416
      $region72: #{gpt_lm_forward.3} parent=63 // pred_fallthru
        _
    $region64: #{gpt_lm_forward.3} parent=5 // pred_fallthru
      _
    %p418 = scmp.le.s32.totalorder 1, %s20
    %p419 = scmp.lt.s32.totalorder %s20, 3
    %p420 = pnand %p418, %p419
    %p421 = pneg %p420
    // Predicated region
    $region73: #{gpt_lm_forward.3} parent=5 // pred_check
      _
    $region74: #{gpt_lm_forward.3} parent=5 // pred_check_branch
      %423 = sbr.rel (%p420) target = $region76
    $region75: #{gpt_lm_forward.3} parent=5 // pred_region
      %s424 = ssub.s32 %s20, 1
      %p425 = scmp.lt.s32.totalorder %s25, 1
      %s426 = scalar_select %p425, %s25, 1
      %s427 = smul.addr %s426, 8
      %s428 = scalar_lea.vmem %s0, %s427
      %p429 = pneg %p46
      %p430 = pneg %p43
      %p431 = scmp.lt.s32.totalorder %s25, 1
      %s432 = scalar_select %p431, %s25, 1
      %s433 = scalar_lea.vmem %s1, %s432
      %p434 = pneg %p72
      %p435 = pneg %p69
      %p436 = pneg %p93
      %p437 = pneg %p90
      %p438 = pneg %p114
      %p439 = pneg %p111
      %p440 = pneg %p135
      %p441 = pneg %p132
      %p442 = pneg %p156
      %p443 = pneg %p153
      %p444 = pneg %p177
      %p445 = pneg %p174
      %p446 = pneg %p198
      %p447 = pneg %p195
      %p448 = pneg %p219
      %p449 = pneg %p216
      %p450 = pneg %p240
      %p451 = pneg %p237
      %p452 = pneg %p261
      %p453 = pneg %p258
      %p454 = pneg %p282
      %p455 = pneg %p279
      %p456 = pneg %p303
      %p457 = pneg %p300
      %p458 = pneg %p324
      %p459 = pneg %p321
      %p460 = pneg %p350
      %p461 = pneg %p347
      %p462 = scmp.lt.s32.totalorder %s25, 1
      %s463 = scalar_select %p462, %s25, 1
      %s464 = smul.addr %s463, 8
      %s465 = scalar_lea.vmem %s14, %s464
      %p466 = scmp.lt.s32.totalorder %s25, 1
      %s467 = scalar_select %p466, %s25, 1
      %s468 = smul.addr %s467, 8
      %s469 = scalar_lea.vmem %s0, %s468
      %p470 = scmp.lt.s32.totalorder %s25, 1
      %s471 = scalar_select %p470, %s25, 1
      %s472 = scalar_lea.vmem %s1, %s471
      %p473 = scmp.lt.s32.totalorder %s25, 1
      %s474 = scalar_select %p473, %s25, 1
      %s475 = smul.addr %s474, 8
      %s476 = scalar_lea.vmem %s14, %s475
      %v477 = vld [vmem:[%s469] sm:$0xff]
      %v478 = vld [vmem:[%s2] sm:$0x1]
      %v479 = vld [vmem:[%s3] sm:$0x1]
      %vm480 = vcmask 261120
      %v481 = vsel %vm480, %v477, 0.0
      %482 = vadd.xlane.f32.xlu0 %v481
      %v483 = vpop.xlane.xlu0 %482
      %v484 = vrcp.pop 32.0
      %v485 = vmul.f32 %v483, %v484
      %v486 = vsub.f32 %v477, %v485
      %v487 = vmul.f32 %v486, %v486
      %v488 = vsel %vm480, %v487, 0.0
      %489 = vadd.xlane.f32.xlu0 %v488
      %v490 = vpop.xlane.xlu0 %489
      %v491 = vmul.f32 %v490, %v484
      %v492 = vadd.f32 %v491, 1e-05
      %v493 = vrsqrt.pop %v492
      %v494 = vmul.f32 %v486, %v493
      %v496 = vlaneseq
      %v497 = vshrl.u32 %v496, 7
      %v498 = vsub.s32 0, %v497
      %v499 = vrot.slane %v478, %v498
      %v501 = vmul.f32 %v494, %v499
      %v503 = vlaneseq
      %v504 = vshrl.u32 %v503, 7
      %v505 = vsub.s32 0, %v504
      %v506 = vrot.slane %v479, %v505
      %v508 = vadd.f32 %v501, %v506
      %v509 = vld [vmem:[%s4] sm:$0xff]
      %v510 = vld [vmem:[%s4 + $0x8] sm:$0xff]
      %v511 = vld [vmem:[%s4 + $0x10] sm:$0xff]
      %v512 = vld [vmem:[%s4 + $0x18] sm:$0xff]
      %v513 = vld [vmem:[%s5] sm:$0x1]
      %v515 = vlaneseq
      %v516 = vshrl.u32 %v515, 7
      %v517 = vsub.s32 0, %v516
      %v518 = vrot.slane %v513, %v517
      %v521 = vsel %vm480, %v508, 0
      %523 = vmatprep.subr.mxu0 0.0
      %524 = vmatpush1.msra.mxu0 %v509
      %525 = vmatprep.subr.mxu0 0.0
      %526 = vmatpush1.msra.mxu0 %v510
      %527 = vmatprep.subr.mxu0 0.0
      %528 = vmatpush1.msra.mxu0 %v511
      %529 = vmatprep.subr.mxu0 0.0
      %530 = vmatpush1.msra.mxu0 %v512
      %531 = vmatprep.subr.mxu0 0.0
      %532 = vmatpush1.msra.mxu0 0.0
      %533 = vmatprep.subr.mxu0 0.0
      %534 = vmatpush1.msra.mxu0 0.0
      %535 = vmatprep.subr.mxu0 0.0
      %536 = vmatpush1.msra.mxu0 0.0
      %537 = vmatprep.subr.mxu0 0.0
      %538 = vmatpush1.msra.mxu0 0.0
      %539 = vmatprep.subr.mxu0 0.0
      %540 = vmatpush1.msra.mxu0 0.0
      %541 = vmatprep.subr.mxu0 0.0
      %542 = vmatpush1.msra.mxu0 0.0
      %543 = vmatprep.subr.mxu0 0.0
      %544 = vmatpush1.msra.mxu0 0.0
      %545 = vmatprep.subr.mxu0 0.0
      %546 = vmatpush1.msra.mxu0 0.0
      %547 = vmatprep.subr.mxu0 0.0
      %548 = vmatpush1.msra.mxu0 0.0
      %549 = vmatprep.subr.mxu0 0.0
      %550 = vmatpush1.msra.mxu0 0.0
      %551 = vmatprep.subr.mxu0 0.0
      %552 = vmatpush1.msra.mxu0 0.0
      %553 = vmatprep.subr.mxu0 0.0
      %554 = vmatpush1.msra.mxu0 0.0
      %555 = vmatprep.subr.mxu0 0.0
      %556 = vmatpush1.msra.mxu0 0.0
      %557 = vmatprep.subr.mxu0 0.0
      %558 = vmatpush1.msra.mxu0 0.0
      %559 = vmatprep.subr.mxu0 0.0
      %560 = vmatpush1.msra.mxu0 0.0
      %561 = vmatprep.subr.mxu0 0.0
      %562 = vmatpush1.msra.mxu0 0.0
      %563 = vmatprep.subr.mxu0 0.0
      %564 = vmatpush1.msra.mxu0 0.0
      %565 = vmatprep.subr.mxu0 0.0
      %566 = vmatpush1.msra.mxu0 0.0
      %567 = vmatprep.subr.mxu0 0.0
      %568 = vmatpush1.msra.mxu0 0.0
      %569 = vmatprep.subr.mxu0 0.0
      %570 = vmatpush1.msra.mxu0 0.0
      %571 = vmatprep.subr.mxu0 0.0
      %572 = vmatpush1.msra.mxu0 0.0
      %573 = vmatprep.subr.mxu0 0.0
      %574 = vmatpush1.msra.mxu0 0.0
      %575 = vmatprep.subr.mxu0 0.0
      %576 = vmatpush1.msra.mxu0 0.0
      %577 = vmatprep.subr.mxu0 0.0
      %578 = vmatpush1.msra.mxu0 0.0
      %579 = vmatprep.subr.mxu0 0.0
      %580 = vmatpush1.msra.mxu0 0.0
      %581 = vmatprep.subr.mxu0 0.0
      %582 = vmatpush1.msra.mxu0 0.0
      %583 = vmatprep.subr.mxu0 0.0
      %584 = vmatpush1.msra.mxu0 0.0
      %585 = vmatprep.subr.mxu0 0.0
      %586 = vmatpush1.msra.mxu0 0.0
      %587 = vmatprep.mubr.f32.mxu0 0.0
      %588 = vmatmul.mubr.f32.gmra.mrb[0].mxu0 %v521
      %v589 = vpop.f32.mrb[0].mxu0
      %v590 = vadd.f32 %v518, %v589
      %v591 = vpop.f32.mrb[0].mxu0
      %592 = vdwg.mxu0
      %v593 = vlaneseq
      %v594 = vshrl.u32 %v593, 7
      %v595 = vlaneseq
      %v596 = vand.u32 %v595, 127
      %vm597 = vcmp.le.s32.totalorder %v596, %v594
      %v598 = vld [vmem:[%s472] sm:$0x1]
      %vm599 = vcmp.gt.f32.partialorder %v598, 0.5
      %v600 = vsel %vm599, 1, 0
      %v601 = vlaneseq
      %v602 = vshrl.u32 %v601, 7
      %v603 = vsub.s32 0, %v602
      %v604 = vrot.slane %v600, %v603
      %vm605 = vcmp.eq.s32.totalorder %v604, 1
      %vm606 = vmand %vm597, %vm605
      %v607 = vld [vmem:[%s6] sm:$0xff]
      %v608 = vld [vmem:[%s6 + $0x8] sm:$0xff]
      %v609 = vld [vmem:[%s6 + $0x10] sm:$0xff]
      %v610 = vld [vmem:[%s6 + $0x18] sm:$0xff]
      %612 = vrot.lane.b32.xlu0 %v590, 96
      %v613 = vpop.permute.xlu0 %612
      %vm614 = vcmask 130048
      %v615 = vsel %vm614, %v590, 0
      %v617 = vsel %vm614, %v613, 0
      %619 = vmatprep.subr.mxu0 0.0
      %620 = vmatpush1.xpose.msra.mxu0 %v617
      %621 = vmatprep.subr.mxu0 0.0
      %622 = vmatpush1.xpose.msra.mxu0 0.0
      %623 = vmatprep.subr.mxu0 0.0
      %624 = vmatpush1.xpose.msra.mxu0 0.0
      %625 = vmatprep.subr.mxu0 0.0
      %626 = vmatpush1.xpose.msra.mxu0 0.0
      %627 = vmatprep.subr.mxu0 0.0
      %628 = vmatpush1.xpose.msra.mxu0 0.0
      %629 = vmatprep.subr.mxu0 0.0
      %630 = vmatpush1.xpose.msra.mxu0 0.0
      %631 = vmatprep.subr.mxu0 0.0
      %632 = vmatpush1.xpose.msra.mxu0 0.0
      %633 = vmatprep.subr.mxu0 0.0
      %634 = vmatpush1.xpose.msra.mxu0 0.0
      %635 = vmatprep.subr.mxu0 0.0
      %636 = vmatpush1.xpose.msra.mxu0 0.0
      %637 = vmatprep.subr.mxu0 0.0
      %638 = vmatpush1.xpose.msra.mxu0 0.0
      %639 = vmatprep.subr.mxu0 0.0
      %640 = vmatpush1.xpose.msra.mxu0 0.0
      %641 = vmatprep.subr.mxu0 0.0
      %642 = vmatpush1.xpose.msra.mxu0 0.0
      %643 = vmatprep.subr.mxu0 0.0
      %644 = vmatpush1.xpose.msra.mxu0 0.0
      %645 = vmatprep.subr.mxu0 0.0
      %646 = vmatpush1.xpose.msra.mxu0 0.0
      %647 = vmatprep.subr.mxu0 0.0
      %648 = vmatpush1.xpose.msra.mxu0 0.0
      %649 = vmatprep.subr.mxu0 0.0
      %650 = vmatpush1.xpose.msra.mxu0 0.0
      %651 = vmatprep.subr.mxu0 0.0
      %652 = vmatpush1.xpose.msra.mxu0 0.0
      %653 = vmatprep.subr.mxu0 0.0
      %654 = vmatpush1.xpose.msra.mxu0 0.0
      %655 = vmatprep.subr.mxu0 0.0
      %656 = vmatpush1.xpose.msra.mxu0 0.0
      %657 = vmatprep.subr.mxu0 0.0
      %658 = vmatpush1.xpose.msra.mxu0 0.0
      %659 = vmatprep.subr.mxu0 0.0
      %660 = vmatpush1.xpose.msra.mxu0 0.0
      %661 = vmatprep.subr.mxu0 0.0
      %662 = vmatpush1.xpose.msra.mxu0 0.0
      %663 = vmatprep.subr.mxu0 0.0
      %664 = vmatpush1.xpose.msra.mxu0 0.0
      %665 = vmatprep.subr.mxu0 0.0
      %666 = vmatpush1.xpose.msra.mxu0 0.0
      %667 = vmatprep.subr.mxu0 0.0
      %668 = vmatpush1.xpose.msra.mxu0 0.0
      %669 = vmatprep.subr.mxu0 0.0
      %670 = vmatpush1.xpose.msra.mxu0 0.0
      %671 = vmatprep.subr.mxu0 0.0
      %672 = vmatpush1.xpose.msra.mxu0 0.0
      %673 = vmatprep.subr.mxu0 0.0
      %674 = vmatpush1.xpose.msra.mxu0 0.0
      %675 = vmatprep.subr.mxu0 0.0
      %676 = vmatpush1.xpose.msra.mxu0 0.0
      %677 = vmatprep.subr.mxu0 0.0
      %678 = vmatpush1.xpose.msra.mxu0 0.0
      %679 = vmatprep.subr.mxu0 0.0
      %680 = vmatpush1.xpose.msra.mxu0 0.0
      %681 = vmatprep.subr.mxu0 0.0
      %682 = vmatpush1.xpose.msra.mxu0 0.0
      %683 = vmatprep.mubr.f32.mxu0 0.0
      %684 = vmatmul.mubr.f32.gmra.mrb[0].mxu0 %v615
      %v685 = vpop.f32.mrb[0].mxu0
      %v686 = vadd.f32 0.0, %v685
      %v687 = vpop.f32.mrb[0].mxu0
      %688 = vdwg.mxu0
      %v689 = vmul.f32 %v686, 0.25
      %v690 = vsel %vm606, %v689, -1e+09
      %vm691 = vcmask 64512
      %v692 = vsel %vm691, %v690, -inf
      %693 = vmax.xlane.f32.xlu0 %v692
      %v694 = vpop.xlane.xlu0 %693
      %v695 = vsub.f32 %v690, %v694
      %v696 = vmul.f32 %v695, 1.442695
      %v697 = vpow.pop %v696
      %v698 = vsel %vm691, %v697, 0.0
      %699 = vadd.xlane.f32.xlu0 %v698
      %v700 = vpop.xlane.xlu0 %699
      %v701 = vrcp.pop %v700
      %v702 = vmul.f32 %v697, %v701
      %703 = vrot.lane.b32.xlu0 %v590, 64
      %v704 = vpop.permute.xlu0 %703
      %v707 = vsel %vm691, %v702, 0
      %709 = vmatprep.subr.mxu0 0.0
      %710 = vmatpush1.msra.mxu0 %v704
      %711 = vmatprep.subr.mxu0 0.0
      %712 = vmatpush1.msra.mxu0 0.0
      %713 = vmatprep.subr.mxu0 0.0
      %714 = vmatpush1.msra.mxu0 0.0
      %715 = vmatprep.subr.mxu0 0.0
      %716 = vmatpush1.msra.mxu0 0.0
      %717 = vmatprep.subr.mxu0 0.0
      %718 = vmatpush1.msra.mxu0 0.0
      %719 = vmatprep.subr.mxu0 0.0
      %720 = vmatpush1.msra.mxu0 0.0
      %721 = vmatprep.subr.mxu0 0.0
      %722 = vmatpush1.msra.mxu0 0.0
      %723 = vmatprep.subr.mxu0 0.0
      %724 = vmatpush1.msra.mxu0 0.0
      %725 = vmatprep.subr.mxu0 0.0
      %726 = vmatpush1.msra.mxu0 0.0
      %727 = vmatprep.subr.mxu0 0.0
      %728 = vmatpush1.msra.mxu0 0.0
      %729 = vmatprep.subr.mxu0 0.0
      %730 = vmatpush1.msra.mxu0 0.0
      %731 = vmatprep.subr.mxu0 0.0
      %732 = vmatpush1.msra.mxu0 0.0
      %733 = vmatprep.subr.mxu0 0.0
      %734 = vmatpush1.msra.mxu0 0.0
      %735 = vmatprep.subr.mxu0 0.0
      %736 = vmatpush1.msra.mxu0 0.0
      %737 = vmatprep.subr.mxu0 0.0
      %738 = vmatpush1.msra.mxu0 0.0
      %739 = vmatprep.subr.mxu0 0.0
      %740 = vmatpush1.msra.mxu0 0.0
      %741 = vmatprep.subr.mxu0 0.0
      %742 = vmatpush1.msra.mxu0 0.0
      %743 = vmatprep.subr.mxu0 0.0
      %744 = vmatpush1.msra.mxu0 0.0
      %745 = vmatprep.subr.mxu0 0.0
      %746 = vmatpush1.msra.mxu0 0.0
      %747 = vmatprep.subr.mxu0 0.0
      %748 = vmatpush1.msra.mxu0 0.0
      %749 = vmatprep.subr.mxu0 0.0
      %750 = vmatpush1.msra.mxu0 0.0
      %751 = vmatprep.subr.mxu0 0.0
      %752 = vmatpush1.msra.mxu0 0.0
      %753 = vmatprep.subr.mxu0 0.0
      %754 = vmatpush1.msra.mxu0 0.0
      %755 = vmatprep.subr.mxu0 0.0
      %756 = vmatpush1.msra.mxu0 0.0
      %757 = vmatprep.subr.mxu0 0.0
      %758 = vmatpush1.msra.mxu0 0.0
      %759 = vmatprep.subr.mxu0 0.0
      %760 = vmatpush1.msra.mxu0 0.0
      %761 = vmatprep.subr.mxu0 0.0
      %762 = vmatpush1.msra.mxu0 0.0
      %763 = vmatprep.subr.mxu0 0.0
      %764 = vmatpush1.msra.mxu0 0.0
      %765 = vmatprep.subr.mxu0 0.0
      %766 = vmatpush1.msra.mxu0 0.0
      %767 = vmatprep.subr.mxu0 0.0
      %768 = vmatpush1.msra.mxu0 0.0
      %769 = vmatprep.subr.mxu0 0.0
      %770 = vmatpush1.msra.mxu0 0.0
      %771 = vmatprep.subr.mxu0 0.0
      %772 = vmatpush1.msra.mxu0 0.0
      %773 = vmatprep.mubr.f32.mxu0 0.0
      %774 = vmatmul.mubr.f32.gmra.mrb[0].mxu0 %v707
      %v775 = vpop.f32.mrb[0].mxu0
      %v776 = vadd.f32 0.0, %v775
      %v777 = vpop.f32.mrb[0].mxu0
      %778 = vdwg.mxu0
      %779 = vrot.lane.b32.xlu0 %v590, 112
      %v780 = vpop.permute.xlu0 %779
      %781 = vrot.lane.b32.xlu0 %v590, 80
      %v782 = vpop.permute.xlu0 %781
      %v783 = vsel %vm614, %v780, 0
      %v785 = vsel %vm614, %v782, 0
      %787 = vmatprep.subr.mxu0 0.0
      %788 = vmatpush1.xpose.msra.mxu0 %v785
      %789 = vmatprep.subr.mxu0 0.0
      %790 = vmatpush1.xpose.msra.mxu0 0.0
      %791 = vmatprep.subr.mxu0 0.0
      %792 = vmatpush1.xpose.msra.mxu0 0.0
      %793 = vmatprep.subr.mxu0 0.0
      %794 = vmatpush1.xpose.msra.mxu0 0.0
      %795 = vmatprep.subr.mxu0 0.0
      %796 = vmatpush1.xpose.msra.mxu0 0.0
      %797 = vmatprep.subr.mxu0 0.0
      %798 = vmatpush1.xpose.msra.mxu0 0.0
      %799 = vmatprep.subr.mxu0 0.0
      %800 = vmatpush1.xpose.msra.mxu0 0.0
      %801 = vmatprep.subr.mxu0 0.0
      %802 = vmatpush1.xpose.msra.mxu0 0.0
      %803 = vmatprep.subr.mxu0 0.0
      %804 = vmatpush1.xpose.msra.mxu0 0.0
      %805 = vmatprep.subr.mxu0 0.0
      %806 = vmatpush1.xpose.msra.mxu0 0.0
      %807 = vmatprep.subr.mxu0 0.0
      %808 = vmatpush1.xpose.msra.mxu0 0.0
      %809 = vmatprep.subr.mxu0 0.0
      %810 = vmatpush1.xpose.msra.mxu0 0.0
      %811 = vmatprep.subr.mxu0 0.0
      %812 = vmatpush1.xpose.msra.mxu0 0.0
      %813 = vmatprep.subr.mxu0 0.0
      %814 = vmatpush1.xpose.msra.mxu0 0.0
      %815 = vmatprep.subr.mxu0 0.0
      %816 = vmatpush1.xpose.msra.mxu0 0.0
      %817 = vmatprep.subr.mxu0 0.0
      %818 = vmatpush1.xpose.msra.mxu0 0.0
      %819 = vmatprep.subr.mxu0 0.0
      %820 = vmatpush1.xpose.msra.mxu0 0.0
      %821 = vmatprep.subr.mxu0 0.0
      %822 = vmatpush1.xpose.msra.mxu0 0.0
      %823 = vmatprep.subr.mxu0 0.0
      %824 = vmatpush1.xpose.msra.mxu0 0.0
      %825 = vmatprep.subr.mxu0 0.0
      %826 = vmatpush1.xpose.msra.mxu0 0.0
      %827 = vmatprep.subr.mxu0 0.0
      %828 = vmatpush1.xpose.msra.mxu0 0.0
      %829 = vmatprep.subr.mxu0 0.0
      %830 = vmatpush1.xpose.msra.mxu0 0.0
      %831 = vmatprep.subr.mxu0 0.0
      %832 = vmatpush1.xpose.msra.mxu0 0.0
      %833 = vmatprep.subr.mxu0 0.0
      %834 = vmatpush1.xpose.msra.mxu0 0.0
      %835 = vmatprep.subr.mxu0 0.0
      %836 = vmatpush1.xpose.msra.mxu0 0.0
      %837 = vmatprep.subr.mxu0 0.0
      %838 = vmatpush1.xpose.msra.mxu0 0.0
      %839 = vmatprep.subr.mxu0 0.0
      %840 = vmatpush1.xpose.msra.mxu0 0.0
      %841 = vmatprep.subr.mxu0 0.0
      %842 = vmatpush1.xpose.msra.mxu0 0.0
      %843 = vmatprep.subr.mxu0 0.0
      %844 = vmatpush1.xpose.msra.mxu0 0.0
      %845 = vmatprep.subr.mxu0 0.0
      %846 = vmatpush1.xpose.msra.mxu0 0.0
      %847 = vmatprep.subr.mxu0 0.0
      %848 = vmatpush1.xpose.msra.mxu0 0.0
      %849 = vmatprep.subr.mxu0 0.0
      %850 = vmatpush1.xpose.msra.mxu0 0.0
      %851 = vmatprep.mubr.f32.mxu0 0.0
      %852 = vmatmul.mubr.f32.gmra.mrb[0].mxu0 %v783
      %v853 = vpop.f32.mrb[0].mxu0
      %v854 = vadd.f32 0.0, %v853
      %v855 = vpop.f32.mrb[0].mxu0
      %856 = vdwg.mxu0
      %v857 = vmul.f32 %v854, 0.25
      %v858 = vsel %vm606, %v857, -1e+09
      %v859 = vsel %vm691, %v858, -inf
      %860 = vmax.xlane.f32.xlu0 %v859
      %v861 = vpop.xlane.xlu0 %860
      %v862 = vsub.f32 %v858, %v861
      %v863 = vmul.f32 %v862, 1.442695
      %v864 = vpow.pop %v863
      %v865 = vsel %vm691, %v864, 0.0
      %866 = vadd.xlane.f32.xlu0 %v865
      %v867 = vpop.xlane.xlu0 %866
      %v868 = vrcp.pop %v867
      %v869 = vmul.f32 %v864, %v868
      %870 = vrot.lane.b32.xlu0 %v590, 48
      %v871 = vpop.permute.xlu0 %870
      %v874 = vsel %vm691, %v869, 0
      %876 = vmatprep.subr.mxu0 0.0
      %877 = vmatpush1.msra.mxu0 %v871
      %878 = vmatprep.subr.mxu0 0.0
      %879 = vmatpush1.msra.mxu0 0.0
      %880 = vmatprep.subr.mxu0 0.0
      %881 = vmatpush1.msra.mxu0 0.0
      %882 = vmatprep.subr.mxu0 0.0
      %883 = vmatpush1.msra.mxu0 0.0
      %884 = vmatprep.subr.mxu0 0.0
      %885 = vmatpush1.msra.mxu0 0.0
      %886 = vmatprep.subr.mxu0 0.0
      %887 = vmatpush1.msra.mxu0 0.0
      %888 = vmatprep.subr.mxu0 0.0
      %889 = vmatpush1.msra.mxu0 0.0
      %890 = vmatprep.subr.mxu0 0.0
      %891 = vmatpush1.msra.mxu0 0.0
      %892 = vmatprep.subr.mxu0 0.0
      %893 = vmatpush1.msra.mxu0 0.0
      %894 = vmatprep.subr.mxu0 0.0
      %895 = vmatpush1.msra.mxu0 0.0
      %896 = vmatprep.subr.mxu0 0.0
      %897 = vmatpush1.msra.mxu0 0.0
      %898 = vmatprep.subr.mxu0 0.0
      %899 = vmatpush1.msra.mxu0 0.0
      %900 = vmatprep.subr.mxu0 0.0
      %901 = vmatpush1.msra.mxu0 0.0
      %902 = vmatprep.subr.mxu0 0.0
      %903 = vmatpush1.msra.mxu0 0.0
      %904 = vmatprep.subr.mxu0 0.0
      %905 = vmatpush1.msra.mxu0 0.0
      %906 = vmatprep.subr.mxu0 0.0
      %907 = vmatpush1.msra.mxu0 0.0
      %908 = vmatprep.subr.mxu0 0.0
      %909 = vmatpush1.msra.mxu0 0.0
      %910 = vmatprep.subr.mxu0 0.0
      %911 = vmatpush1.msra.mxu0 0.0
      %912 = vmatprep.subr.mxu0 0.0
      %913 = vmatpush1.msra.mxu0 0.0
      %914 = vmatprep.subr.mxu0 0.0
      %915 = vmatpush1.msra.mxu0 0.0
      %916 = vmatprep.subr.mxu0 0.0
      %917 = vmatpush1.msra.mxu0 0.0
      %918 = vmatprep.subr.mxu0 0.0
      %919 = vmatpush1.msra.mxu0 0.0
      %920 = vmatprep.subr.mxu0 0.0
      %921 = vmatpush1.msra.mxu0 0.0
      %922 = vmatprep.subr.mxu0 0.0
      %923 = vmatpush1.msra.mxu0 0.0
      %924 = vmatprep.subr.mxu0 0.0
      %925 = vmatpush1.msra.mxu0 0.0
      %926 = vmatprep.subr.mxu0 0.0
      %927 = vmatpush1.msra.mxu0 0.0
      %928 = vmatprep.subr.mxu0 0.0
      %929 = vmatpush1.msra.mxu0 0.0
      %930 = vmatprep.subr.mxu0 0.0
      %931 = vmatpush1.msra.mxu0 0.0
      %932 = vmatprep.subr.mxu0 0.0
      %933 = vmatpush1.msra.mxu0 0.0
      %934 = vmatprep.subr.mxu0 0.0
      %935 = vmatpush1.msra.mxu0 0.0
      %936 = vmatprep.subr.mxu0 0.0
      %937 = vmatpush1.msra.mxu0 0.0
      %938 = vmatprep.subr.mxu0 0.0
      %939 = vmatpush1.msra.mxu0 0.0
      %940 = vmatprep.mubr.f32.mxu0 0.0
      %941 = vmatmul.mubr.f32.gmra.mrb[0].mxu0 %v874
      %v942 = vpop.f32.mrb[0].mxu0
      %v943 = vadd.f32 0.0, %v942
      %v944 = vpop.f32.mrb[0].mxu0
      %945 = vdwg.mxu0
      %v947 = vsel %vm614, %v943, 0
      %949 = vmatprep.subr.mxu0 0.0
      %950 = vmatpush1.msra.mxu0 %v609
      %951 = vmatprep.subr.mxu0 0.0
      %952 = vmatpush1.msra.mxu0 %v610
      %953 = vmatprep.subr.mxu0 0.0
      %954 = vmatpush1.msra.mxu0 0.0
      %955 = vmatprep.subr.mxu0 0.0
      %956 = vmatpush1.msra.mxu0 0.0
      %957 = vmatprep.subr.mxu0 0.0
      %958 = vmatpush1.msra.mxu0 0.0
      %959 = vmatprep.subr.mxu0 0.0
      %960 = vmatpush1.msra.mxu0 0.0
      %961 = vmatprep.subr.mxu0 0.0
      %962 = vmatpush1.msra.mxu0 0.0
      %963 = vmatprep.subr.mxu0 0.0
      %964 = vmatpush1.msra.mxu0 0.0
      %965 = vmatprep.subr.mxu0 0.0
      %966 = vmatpush1.msra.mxu0 0.0
      %967 = vmatprep.subr.mxu0 0.0
      %968 = vmatpush1.msra.mxu0 0.0
      %969 = vmatprep.subr.mxu0 0.0
      %970 = vmatpush1.msra.mxu0 0.0
      %971 = vmatprep.subr.mxu0 0.0
      %972 = vmatpush1.msra.mxu0 0.0
      %973 = vmatprep.subr.mxu0 0.0
      %974 = vmatpush1.msra.mxu0 0.0
      %975 = vmatprep.subr.mxu0 0.0
      %976 = vmatpush1.msra.mxu0 0.0
      %977 = vmatprep.subr.mxu0 0.0
      %978 = vmatpush1.msra.mxu0 0.0
      %979 = vmatprep.subr.mxu0 0.0
      %980 = vmatpush1.msra.mxu0 0.0
      %981 = vmatprep.subr.mxu0 0.0
      %982 = vmatpush1.msra.mxu0 0.0
      %983 = vmatprep.subr.mxu0 0.0
      %984 = vmatpush1.msra.mxu0 0.0
      %985 = vmatprep.subr.mxu0 0.0
      %986 = vmatpush1.msra.mxu0 0.0
      %987 = vmatprep.subr.mxu0 0.0
      %988 = vmatpush1.msra.mxu0 0.0
      %989 = vmatprep.subr.mxu0 0.0
      %990 = vmatpush1.msra.mxu0 0.0
      %991 = vmatprep.subr.mxu0 0.0
      %992 = vmatpush1.msra.mxu0 0.0
      %993 = vmatprep.subr.mxu0 0.0
      %994 = vmatpush1.msra.mxu0 0.0
      %995 = vmatprep.subr.mxu0 0.0
      %996 = vmatpush1.msra.mxu0 0.0
      %997 = vmatprep.subr.mxu0 0.0
      %998 = vmatpush1.msra.mxu0 0.0
      %999 = vmatprep.subr.mxu0 0.0
      %1000 = vmatpush1.msra.mxu0 0.0
      %1001 = vmatprep.subr.mxu0 0.0
      %1002 = vmatpush1.msra.mxu0 0.0
      %1003 = vmatprep.subr.mxu0 0.0
      %1004 = vmatpush1.msra.mxu0 0.0
      %1005 = vmatprep.subr.mxu0 0.0
      %1006 = vmatpush1.msra.mxu0 0.0
      %1007 = vmatprep.subr.mxu0 0.0
      %1008 = vmatpush1.msra.mxu0 0.0
      %1009 = vmatprep.subr.mxu0 0.0
      %1010 = vmatpush1.msra.mxu0 0.0
      %1011 = vmatprep.subr.mxu0 0.0
      %1012 = vmatpush1.msra.mxu0 0.0
      %1013 = vmatprep.mubr.f32.mxu0 0.0
      %1014 = vmatmul.mubr.f32.gmra.mrb[0].mxu0 %v947
      %v1015 = vpop.f32.mrb[0].mxu0
      %v1016 = vadd.f32 0.0, %v1015
      %v1017 = vpop.f32.mrb[0].mxu0
      %1018 = vdwg.mxu0
      %v1020 = vsel %vm614, %v776, 0
      %1022 = vmatprep.subr.mxu0 0.0
      %1023 = vmatpush1.msra.mxu0 %v607
      %1024 = vmatprep.subr.mxu0 0.0
      %1025 = vmatpush1.msra.mxu0 %v608
      %1026 = vmatprep.subr.mxu0 0.0
      %1027 = vmatpush1.msra.mxu0 0.0
      %1028 = vmatprep.subr.mxu0 0.0
      %1029 = vmatpush1.msra.mxu0 0.0
      %1030 = vmatprep.subr.mxu0 0.0
      %1031 = vmatpush1.msra.mxu0 0.0
      %1032 = vmatprep.subr.mxu0 0.0
      %1033 = vmatpush1.msra.mxu0 0.0
      %1034 = vmatprep.subr.mxu0 0.0
      %1035 = vmatpush1.msra.mxu0 0.0
      %1036 = vmatprep.subr.mxu0 0.0
      %1037 = vmatpush1.msra.mxu0 0.0
      %1038 = vmatprep.subr.mxu0 0.0
      %1039 = vmatpush1.msra.mxu0 0.0
      %1040 = vmatprep.subr.mxu0 0.0
      %1041 = vmatpush1.msra.mxu0 0.0
      %1042 = vmatprep.subr.mxu0 0.0
      %1043 = vmatpush1.msra.mxu0 0.0
      %1044 = vmatprep.subr.mxu0 0.0
      %1045 = vmatpush1.msra.mxu0 0.0
      %1046 = vmatprep.subr.mxu0 0.0
      %1047 = vmatpush1.msra.mxu0 0.0
      %1048 = vmatprep.subr.mxu0 0.0
      %1049 = vmatpush1.msra.mxu0 0.0
      %1050 = vmatprep.subr.mxu0 0.0
      %1051 = vmatpush1.msra.mxu0 0.0
      %1052 = vmatprep.subr.mxu0 0.0
      %1053 = vmatpush1.msra.mxu0 0.0
      %1054 = vmatprep.subr.mxu0 0.0
      %1055 = vmatpush1.msra.mxu0 0.0
      %1056 = vmatprep.subr.mxu0 0.0
      %1057 = vmatpush1.msra.mxu0 0.0
      %1058 = vmatprep.subr.mxu0 0.0
      %1059 = vmatpush1.msra.mxu0 0.0
      %1060 = vmatprep.subr.mxu0 0.0
      %1061 = vmatpush1.msra.mxu0 0.0
      %1062 = vmatprep.subr.mxu0 0.0
      %1063 = vmatpush1.msra.mxu0 0.0
      %1064 = vmatprep.subr.mxu0 0.0
      %1065 = vmatpush1.msra.mxu0 0.0
      %1066 = vmatprep.subr.mxu0 0.0
      %1067 = vmatpush1.msra.mxu0 0.0
      %1068 = vmatprep.subr.mxu0 0.0
      %1069 = vmatpush1.msra.mxu0 0.0
      %1070 = vmatprep.subr.mxu0 0.0
      %1071 = vmatpush1.msra.mxu0 0.0
      %1072 = vmatprep.subr.mxu0 0.0
      %1073 = vmatpush1.msra.mxu0 0.0
      %1074 = vmatprep.subr.mxu0 0.0
      %1075 = vmatpush1.msra.mxu0 0.0
      %1076 = vmatprep.subr.mxu0 0.0
      %1077 = vmatpush1.msra.mxu0 0.0
      %1078 = vmatprep.subr.mxu0 0.0
      %1079 = vmatpush1.msra.mxu0 0.0
      %1080 = vmatprep.subr.mxu0 0.0
      %1081 = vmatpush1.msra.mxu0 0.0
      %1082 = vmatprep.subr.mxu0 0.0
      %1083 = vmatpush1.msra.mxu0 0.0
      %1084 = vmatprep.subr.mxu0 0.0
      %1085 = vmatpush1.msra.mxu0 0.0
      %1086 = vmatprep.mubr.f32.mxu0 0.0
      %1087 = vmatmul.mubr.f32.gmra.mrb[0].mxu0 %v1020
      %v1088 = vpop.f32.mrb[0].mxu0
      %v1089 = vadd.f32 %v1016, %v1088
      %v1090 = vpop.f32.mrb[0].mxu0
      %1091 = vdwg.mxu0
      %v1092 = vadd.f32 %v477, %v1089
      %v1093 = vld [vmem:[%s7] sm:$0x1]
      %v1095 = vlaneseq
      %v1096 = vshrl.u32 %v1095, 7
      %v1097 = vsub.s32 0, %v1096
      %v1098 = vrot.slane %v1093, %v1097
      %v1100 = vadd.f32 %v1092, %v1098
      %v1101 = vld [vmem:[%s8] sm:$0x1]
      %v1102 = vld [vmem:[%s9] sm:$0x1]
      %v1103 = vsel %vm480, %v1100, 0.0
      %1104 = vadd.xlane.f32.xlu0 %v1103
      %v1105 = vpop.xlane.xlu0 %1104
      %v1106 = vmul.f32 %v1105, %v484
      %v1107 = vsub.f32 %v1100, %v1106
      %v1108 = vmul.f32 %v1107, %v1107
      %v1109 = vsel %vm480, %v1108, 0.0
      %1110 = vadd.xlane.f32.xlu0 %v1109
      %v1111 = vpop.xlane.xlu0 %1110
      %v1112 = vmul.f32 %v1111, %v484
      %v1113 = vadd.f32 %v1112, 1e-05
      %v1114 = vrsqrt.pop %v1113
      %v1115 = vmul.f32 %v1107, %v1114
      %v1117 = vlaneseq
      %v1118 = vshrl.u32 %v1117, 7
      %v1119 = vsub.s32 0, %v1118
      %v1120 = vrot.slane %v1101, %v1119
      %v1122 = vmul.f32 %v1115, %v1120
      %v1124 = vlaneseq
      %v1125 = vshrl.u32 %v1124, 7
      %v1126 = vsub.s32 0, %v1125
      %v1127 = vrot.slane %v1102, %v1126
      %v1129 = vadd.f32 %v1122, %v1127
      %v1130 = vld [vmem:[%s10] sm:$0xff]
      %v1131 = vld [vmem:[%s10 + $0x8] sm:$0xff]
      %v1132 = vld [vmem:[%s10 + $0x10] sm:$0xff]
      %v1133 = vld [vmem:[%s10 + $0x18] sm:$0xff]
      %v1134 = vld [vmem:[%s11] sm:$0x1]
      %v1136 = vlaneseq
      %v1137 = vshrl.u32 %v1136, 7
      %v1138 = vsub.s32 0, %v1137
      %v1139 = vrot.slane %v1134, %v1138
      %v1142 = vsel %vm480, %v1129, 0
      %1144 = vmatprep.subr.mxu0 0.0
      %1145 = vmatpush1.msra.mxu0 %v1130
      %1146 = vmatprep.subr.mxu0 0.0
      %1147 = vmatpush1.msra.mxu0 %v1131
      %1148 = vmatprep.subr.mxu0 0.0
      %1149 = vmatpush1.msra.mxu0 %v1132
      %1150 = vmatprep.subr.mxu0 0.0
      %1151 = vmatpush1.msra.mxu0 %v1133
      %1152 = vmatprep.subr.mxu0 0.0
      %1153 = vmatpush1.msra.mxu0 0.0
      %1154 = vmatprep.subr.mxu0 0.0
      %1155 = vmatpush1.msra.mxu0 0.0
      %1156 = vmatprep.subr.mxu0 0.0
      %1157 = vmatpush1.msra.mxu0 0.0
      %1158 = vmatprep.subr.mxu0 0.0
      %1159 = vmatpush1.msra.mxu0 0.0
      %1160 = vmatprep.subr.mxu0 0.0
      %1161 = vmatpush1.msra.mxu0 0.0
      %1162 = vmatprep.subr.mxu0 0.0
      %1163 = vmatpush1.msra.mxu0 0.0
      %1164 = vmatprep.subr.mxu0 0.0
      %1165 = vmatpush1.msra.mxu0 0.0
      %1166 = vmatprep.subr.mxu0 0.0
      %1167 = vmatpush1.msra.mxu0 0.0
      %1168 = vmatprep.subr.mxu0 0.0
      %1169 = vmatpush1.msra.mxu0 0.0
      %1170 = vmatprep.subr.mxu0 0.0
      %1171 = vmatpush1.msra.mxu0 0.0
      %1172 = vmatprep.subr.mxu0 0.0
      %1173 = vmatpush1.msra.mxu0 0.0
      %1174 = vmatprep.subr.mxu0 0.0
      %1175 = vmatpush1.msra.mxu0 0.0
      %1176 = vmatprep.subr.mxu0 0.0
      %1177 = vmatpush1.msra.mxu0 0.0
      %1178 = vmatprep.subr.mxu0 0.0
      %1179 = vmatpush1.msra.mxu0 0.0
      %1180 = vmatprep.subr.mxu0 0.0
      %1181 = vmatpush1.msra.mxu0 0.0
      %1182 = vmatprep.subr.mxu0 0.0
      %1183 = vmatpush1.msra.mxu0 0.0
      %1184 = vmatprep.subr.mxu0 0.0
      %1185 = vmatpush1.msra.mxu0 0.0
      %1186 = vmatprep.subr.mxu0 0.0
      %1187 = vmatpush1.msra.mxu0 0.0
      %1188 = vmatprep.subr.mxu0 0.0
      %1189 = vmatpush1.msra.mxu0 0.0
      %1190 = vmatprep.subr.mxu0 0.0
      %1191 = vmatpush1.msra.mxu0 0.0
      %1192 = vmatprep.subr.mxu0 0.0
      %1193 = vmatpush1.msra.mxu0 0.0
      %1194 = vmatprep.subr.mxu0 0.0
      %1195 = vmatpush1.msra.mxu0 0.0
      %1196 = vmatprep.subr.mxu0 0.0
      %1197 = vmatpush1.msra.mxu0 0.0
      %1198 = vmatprep.subr.mxu0 0.0
      %1199 = vmatpush1.msra.mxu0 0.0
      %1200 = vmatprep.subr.mxu0 0.0
      %1201 = vmatpush1.msra.mxu0 0.0
      %1202 = vmatprep.subr.mxu0 0.0
      %1203 = vmatpush1.msra.mxu0 0.0
      %1204 = vmatprep.subr.mxu0 0.0
      %1205 = vmatpush1.msra.mxu0 0.0
      %1206 = vmatprep.subr.mxu0 0.0
      %1207 = vmatpush1.msra.mxu0 0.0
      %1208 = vmatprep.mubr.f32.mxu0 0.0
      %1209 = vmatmul.mubr.f32.gmra.mrb[0].mxu0 %v1142
      %v1210 = vpop.f32.mrb[0].mxu0
      %v1211 = vadd.f32 %v1139, %v1210
      %v1212 = vpop.f32.mrb[0].mxu0
      %1213 = vdwg.mxu0
      %v1214 = vmul.f32 %v1211, 0.5
      %v1215 = vmul.f32 %v1211, 0.044715
      %v1216 = vmul.f32 %v1215, %v1211
      %v1217 = vmul.f32 %v1216, %v1211
      %v1218 = vadd.f32 %v1211, %v1217
      %v1219 = vmul.f32 %v1218, 0.7978846
      %v1220 = vtanh.pop %v1219
      %v1221 = vadd.f32 %v1220, 1.0
      %v1222 = vmul.f32 %v1214, %v1221
      %v1223 = vld [vmem:[%s12] sm:$0xff]
      %v1224 = vld [vmem:[%s12 + $0x8] sm:$0xff]
      %v1225 = vld [vmem:[%s12 + $0x10] sm:$0xff]
      %v1226 = vld [vmem:[%s12 + $0x18] sm:$0xff]
      %v1227 = vld [vmem:[%s12 + $0x20] sm:$0xff]
      %v1228 = vld [vmem:[%s12 + $0x28] sm:$0xff]
      %v1229 = vld [vmem:[%s12 + $0x30] sm:$0xff]
      %v1230 = vld [vmem:[%s12 + $0x38] sm:$0xff]
      %v1231 = vld [vmem:[%s12 + $0x40] sm:$0xff]
      %v1232 = vld [vmem:[%s12 + $0x48] sm:$0xff]
      %v1233 = vld [vmem:[%s12 + $0x50] sm:$0xff]
      %v1234 = vld [vmem:[%s12 + $0x58] sm:$0xff]
      %v1235 = vld [vmem:[%s12 + $0x60] sm:$0xff]
      %v1236 = vld [vmem:[%s12 + $0x68] sm:$0xff]
      %v1237 = vld [vmem:[%s12 + $0x70] sm:$0xff]
      %v1238 = vld [vmem:[%s12 + $0x78] sm:$0xff]
      %1239 = vmatprep.subr.mxu0 0.0
      %1240 = vmatpush1.msra.mxu0 %v1223
      %1241 = vmatprep.subr.mxu0 0.0
      %1242 = vmatpush1.msra.mxu0 %v1224
      %1243 = vmatprep.subr.mxu0 0.0
      %1244 = vmatpush1.msra.mxu0 %v1225
      %1245 = vmatprep.subr.mxu0 0.0
      %1246 = vmatpush1.msra.mxu0 %v1226
      %1247 = vmatprep.subr.mxu0 0.0
      %1248 = vmatpush1.msra.mxu0 %v1227
      %1249 = vmatprep.subr.mxu0 0.0
      %1250 = vmatpush1.msra.mxu0 %v1228
      %1251 = vmatprep.subr.mxu0 0.0
      %1252 = vmatpush1.msra.mxu0 %v1229
      %1253 = vmatprep.subr.mxu0 0.0
      %1254 = vmatpush1.msra.mxu0 %v1230
      %1255 = vmatprep.subr.mxu0 0.0
      %1256 = vmatpush1.msra.mxu0 %v1231
      %1257 = vmatprep.subr.mxu0 0.0
      %1258 = vmatpush1.msra.mxu0 %v1232
      %1259 = vmatprep.subr.mxu0 0.0
      %1260 = vmatpush1.msra.mxu0 %v1233
      %1261 = vmatprep.subr.mxu0 0.0
      %1262 = vmatpush1.msra.mxu0 %v1234
      %1263 = vmatprep.subr.mxu0 0.0
      %1264 = vmatpush1.msra.mxu0 %v1235
      %1265 = vmatprep.subr.mxu0 0.0
      %1266 = vmatpush1.msra.mxu0 %v1236
      %1267 = vmatprep.subr.mxu0 0.0
      %1268 = vmatpush1.msra.mxu0 %v1237
      %1269 = vmatprep.subr.mxu0 0.0
      %1270 = vmatpush1.msra.mxu0 %v1238
      %1271 = vmatprep.subr.mxu0 0.0
      %1272 = vmatpush1.msra.mxu0 0.0
      %1273 = vmatprep.subr.mxu0 0.0
      %1274 = vmatpush1.msra.mxu0 0.0
      %1275 = vmatprep.subr.mxu0 0.0
      %1276 = vmatpush1.msra.mxu0 0.0
      %1277 = vmatprep.subr.mxu0 0.0
      %1278 = vmatpush1.msra.mxu0 0.0
      %1279 = vmatprep.subr.mxu0 0.0
      %1280 = vmatpush1.msra.mxu0 0.0
      %1281 = vmatprep.subr.mxu0 0.0
      %1282 = vmatpush1.msra.mxu0 0.0
      %1283 = vmatprep.subr.mxu0 0.0
      %1284 = vmatpush1.msra.mxu0 0.0
      %1285 = vmatprep.subr.mxu0 0.0
      %1286 = vmatpush1.msra.mxu0 0.0
      %1287 = vmatprep.subr.mxu0 0.0
      %1288 = vmatpush1.msra.mxu0 0.0
      %1289 = vmatprep.subr.mxu0 0.0
      %1290 = vmatpush1.msra.mxu0 0.0
      %1291 = vmatprep.subr.mxu0 0.0
      %1292 = vmatpush1.msra.mxu0 0.0
      %1293 = vmatprep.subr.mxu0 0.0
      %1294 = vmatpush1.msra.mxu0 0.0
      %1295 = vmatprep.subr.mxu0 0.0
      %1296 = vmatpush1.msra.mxu0 0.0
      %1297 = vmatprep.subr.mxu0 0.0
      %1298 = vmatpush1.msra.mxu0 0.0
      %1299 = vmatprep.subr.mxu0 0.0
      %1300 = vmatpush1.msra.mxu0 0.0
      %1301 = vmatprep.subr.mxu0 0.0
      %1302 = vmatpush1.msra.mxu0 0.0
      %1303 = vmatprep.mubr.f32.mxu0 0.0
      %1304 = vmatmul.mubr.f32.gmra.mrb[0].mxu0 %v1222
      %v1305 = vpop.f32.mrb[0].mxu0
      %v1306 = vadd.f32 0.0, %v1305
      %v1307 = vpop.f32.mrb[0].mxu0
      %1308 = vdwg.mxu0
      %v1309 = vadd.f32 %v1100, %v1306
      %v1310 = vld [vmem:[%s13] sm:$0x1]
      %v1312 = vlaneseq
      %v1313 = vshrl.u32 %v1312, 7
      %v1314 = vsub.s32 0, %v1313
      %v1315 = vrot.slane %v1310, %v1314
      %v1317 = vadd.f32 %v1309, %v1315
      %1318 = vst.msk [vmem:[%s476] sm:$0xff] %vm480, %v1317
      %p1319 = scmp.lt.s32.totalorder %s25, 1
      %s1320 = scalar_select %p1319, %s25, 1
      %s1321 = smul.addr %s1320, 8
      %s1322 = scalar_lea.vmem %s14, %s1321
      // Predicated region
      $region77: #{gpt_lm_forward.3} parent=75 // pred_check
        %p1323 = pneg %p347
      $region78: #{gpt_lm_forward.3} parent=75 // pred_check_branch
        %1325 = sbr.rel (%p1323) target = $region80
      $region79: #{gpt_lm_forward.3} parent=75 // pred_region
        _
      $region80: #{gpt_lm_forward.3} parent=75 // pred_fallthru
        _
    $region76: #{gpt_lm_forward.3} parent=5 // pred_fallthru
      _
    %p1326 = scmp.le.s32.totalorder 2, %s20
    // Predicated region
    $region81: #{gpt_lm_forward.3} parent=5 // pred_check
      %p1327 = pneg %p1326
    $region82: #{gpt_lm_forward.3} parent=5 // pred_check_branch
      %1329 = sbr.rel (%p1327) target = $region84
    $region83: #{gpt_lm_forward.3} parent=5 // pred_region
      %s1330 = ssub.s32 %s20, 2
      // Predicated region
      $region85: #{gpt_lm_forward.3} parent=83 // pred_check
        %p1331 = pneg %p353
      $region86: #{gpt_lm_forward.3} parent=83 // pred_check_branch
        %1333 = sbr.rel (%p1331) target = $region88
      $region87: #{gpt_lm_forward.3} parent=83 // pred_region
        %p1334 = scmp.lt.s32.totalorder %s26, 1
        %s1335 = scalar_select %p1334, %s26, 1
        %s1336 = smul.addr %s1335, 8
        %s1337 = scalar_lea.vmem %s14, %s1336
      $region88: #{gpt_lm_forward.3} parent=83 // pred_fallthru
        _
    $region84: #{gpt_lm_forward.3} parent=5 // pred_fallthru
      _
  $region6: #{gpt_lm_forward.3} parent=0 // loop_footer
    %s24 = sadd.s32 1, %s20
  $region7: #{gpt_lm_forward.3} parent=0 // loop_footer_branch
    %19 = sbr.rel target = $region3
  $region8: #{gpt_lm_forward.3} parent=0 // loop_exit
    _

</llo_original>
